<compile_context>
chip_gen: v7x
topology: tpu7x:2x2x1
jax: 0.10.0
libtpu: 0.0.40
codegen_flags: <defaults>
</compile_context>

<pallas_src>
import functools

import jax
import jax.numpy as jnp
from jax.experimental import pallas as pl
from jax.experimental.pallas import tpu as pltpu

# Explicit scoped-VMEM limit: above the 16/32 MiB defaults, below v7x physical.
_VMEM_LIMIT = 48 * 1024 * 1024


# ----------------------------------------------------------------------------
# Tile-size selection helpers
# ----------------------------------------------------------------------------

def _sublane(dtype):
    """Sublane packing of the second-minor dim for this dtype."""
    return {4: 8, 2: 16, 1: 32}.get(jnp.dtype(dtype).itemsize, 8)


def _pick_tile(dim, target, align):
    """Largest multiple of `align` that divides `dim` and is <= target.
    Falls back to the full dim (always legal: block == array extent)."""
    if dim <= target:
        return dim
    t = (target // align) * align
    while t >= align:
        if dim % t == 0:
            return t
        t -= align
    return dim


# ----------------------------------------------------------------------------
# Kernel 1: tiled matmul + bias (+ optional ReLU)
#   y = x @ W + b ; f32 accumulator in VMEM scratch, K axis innermost.
#   (Also reused for the stacked QKV projection via squeezed leading blocks.)
# ----------------------------------------------------------------------------

def _mm_bias_kernel(x_ref, w_ref, b_ref, o_ref, acc_ref, *, relu):
    k = pl.program_id(pl.num_programs(0) * 0 + (o_ref.ndim and 0) or 0)  # placeholder (overwritten below)


def _mm_bias_kernel(x_ref, w_ref, b_ref, o_ref, acc_ref, *, relu, k_axis):
    k = pl.program_id(k_axis)

    @pl.when(k == 0)
    def _init():
        acc_ref[...] = jnp.zeros_like(acc_ref)

    acc_ref[...] += jnp.dot(x_ref[...], w_ref[...],
                            preferred_element_type=jnp.float32)

    @pl.when(k == pl.num_programs(k_axis) - 1)
    def _finalize():
        y = acc_ref[...] + b_ref[...].astype(jnp.float32)
        if relu:
            y = jnp.maximum(y, 0.0)
        o_ref[...] = y.astype(o_ref.dtype)


def matmul_bias(x, w, b, relu=False, *, tm=512, tn=512, tk=1024):
    """x: (M, K), w: (K, N), b: (1, N) -> (M, N)."""
    M, K = x.shape
    _, N = w.shape
    tm = _pick_tile(M, tm, _sublane(x.dtype))
    tn = _pick_tile(N, tn, 128)
    tk = _pick_tile(K, tk, 128)
    grid = (M // tm, N // tn, K // tk)
    return pl.pallas_call(
        functools.partial(_mm_bias_kernel, relu=relu, k_axis=2),
        grid=grid,
        in_specs=[
            pl.BlockSpec((tm, tk), lambda i, j, k: (i, k)),
            pl.BlockSpec((tk, tn), lambda i, j, k: (k, j)),
            pl.BlockSpec((1, tn), lambda i, j, k: (0, j)),
        ],
        out_specs=pl.BlockSpec((tm, tn), lambda i, j, k: (i, j)),
        out_shape=jax.ShapeDtypeStruct((M, N), x.dtype),
        scratch_shapes=[pltpu.VMEM((tm, tn), jnp.float32)],
        compiler_params=pltpu.CompilerParams(
            dimension_semantics=("parallel", "parallel", "arbitrary"),
            vmem_limit_bytes=_VMEM_LIMIT),
    )(x, w, b)


def qkv_projection(x, w3, b3, *, tm=512, tn=512, tk=1024):
    """Fused Q/K/V projection against a stacked weight.

    x: (M, K), w3: (3, K, N), b3: (3, 1, N) -> (3, M, N).
    The leading stacked axis is a grid dim with a squeezed (None) block, so
    each of Q/K/V lands in its own contiguous buffer (free reshapes later)."""
    M, K = x.shape
    _, _, N = w3.shape
    tm = _pick_tile(M, tm, _sublane(x.dtype))
    tn = _pick_tile(N, tn, 128)
    tk = _pick_tile(K, tk, 128)
    grid = (3, M // tm, N // tn, K // tk)
    return pl.pallas_call(
        functools.partial(_mm_bias_kernel, relu=False, k_axis=3),
        grid=grid,
        in_specs=[
            pl.BlockSpec((tm, tk), lambda q, i, j, k: (i, k)),
            pl.BlockSpec((None, tk, tn), lambda q, i, j, k: (q, k, j)),
            pl.BlockSpec((None, 1, tn), lambda q, i, j, k: (q, 0, j)),
        ],
        out_specs=pl.BlockSpec((None, tm, tn), lambda q, i, j, k: (q, i, j)),
        out_shape=jax.ShapeDtypeStruct((3, M, N), x.dtype),
        scratch_shapes=[pltpu.VMEM((tm, tn), jnp.float32)],
        compiler_params=pltpu.CompilerParams(
            dimension_semantics=("parallel", "parallel", "parallel", "arbitrary"),
            vmem_limit_bytes=_VMEM_LIMIT),
    )(x, w3, b3)


# ----------------------------------------------------------------------------
# Kernel 2: tiled matmul + bias + residual + LayerNorm (fused epilogue)
#   out = LayerNorm(x @ W + b + residual)
#   Output block keeps the FULL feature dim so the LN reduction stays in-tile.
#   Defaults (tm=128, tk=512) keep the full-D f32 accumulator + weight tiles
#   inside v7x's 64 MiB VMEM at D=4096.
# ----------------------------------------------------------------------------

def _mm_bias_res_ln_kernel(x_ref, w_ref, b_ref, r_ref, g_ref, beta_ref,
                           o_ref, acc_ref, *, eps):
    k = pl.program_id(1)

    @pl.when(k == 0)
    def _init():
        acc_ref[...] = jnp.zeros_like(acc_ref)

    acc_ref[...] += jnp.dot(x_ref[...], w_ref[...],
                            preferred_element_type=jnp.float32)

    @pl.when(k == pl.num_programs(1) - 1)
    def _finalize():
        y = (acc_ref[...] + b_ref[...].astype(jnp.float32)
             + r_ref[...].astype(jnp.float32))
        mean = jnp.mean(y, axis=-1, keepdims=True)
        c = y - mean
        var = jnp.mean(c * c, axis=-1, keepdims=True)   # biased, as nn.LayerNorm
        norm = c * jax.lax.rsqrt(var + eps)
        o_ref[...] = (norm * g_ref[...].astype(jnp.float32)
                      + beta_ref[...].astype(jnp.float32)).astype(o_ref.dtype)


def matmul_bias_residual_layernorm(x, w, b, residual, gamma, beta,
                                   eps=1e-5, *, tm=128, tk=512):
    """x: (M, K), w: (K, D), b/gamma/beta: (1, D), residual: (M, D) -> (M, D)."""
    M, K = x.shape
    _, D = w.shape
    tm = _pick_tile(M, tm, _sublane(x.dtype))
    tk = _pick_tile(K, tk, 128)
    grid = (M // tm, K // tk)
    return pl.pallas_call(
        functools.partial(_mm_bias_res_ln_kernel, eps=eps),
        grid=grid,
        in_specs=[
            pl.BlockSpec((tm, tk), lambda i, k: (i, k)),
            pl.BlockSpec((tk, D), lambda i, k: (k, 0)),
            pl.BlockSpec((1, D), lambda i, k: (0, 0)),
            pl.BlockSpec((tm, D), lambda i, k: (i, 0)),
            pl.BlockSpec((1, D), lambda i, k: (0, 0)),
            pl.BlockSpec((1, D), lambda i, k: (0, 0)),
        ],
        out_specs=pl.BlockSpec((tm, D), lambda i, k: (i, 0)),
        out_shape=jax.ShapeDtypeStruct((M, D), x.dtype),
        scratch_shapes=[pltpu.VMEM((tm, D), jnp.float32)],
        compiler_params=pltpu.CompilerParams(
            dimension_semantics=("parallel", "arbitrary"),
            vmem_limit_bytes=_VMEM_LIMIT),
    )(x, w, b, residual, gamma, beta)


# ----------------------------------------------------------------------------
# Kernel 3: scaled-dot-product attention, multiple (batch*head) slices / step
#   (The 1/sqrt(dh) scale is already folded into the Q projection weights.)
# ----------------------------------------------------------------------------

def _attn_kernel(q_ref, k_ref, v_ref, o_ref):
    q = q_ref[...]
    k = k_ref[...]
    v = v_ref[...]
    # Batched Q @ K^T via einsum (contracts last dims; no explicit transpose).
    s = jnp.einsum('hqd,hkd->hqk', q, k,
                   preferred_element_type=jnp.float32)        # (hb, S, S) f32
    m = jnp.max(s, axis=-1, keepdims=True)
    p = jnp.exp(s - m)
    denom = jnp.sum(p, axis=-1, keepdims=True)
    inv = pl.reciprocal(denom, approx=True)       # EUP slot
    inv = inv * (2.0 - denom * inv)               # one Newton step -> f32 accuracy
    attn = (p * inv).astype(v.dtype)
    ctx = jnp.einsum('hqk,hkd->hqd', attn, v,
                     preferred_element_type=jnp.float32)
    o_ref[...] = ctx.astype(o_ref.dtype)
    # TODO(synk): flash-style online-softmax K/V tiling for long S (scores are
    #             O(S^2) f32 VMEM per slice); needed before S ~ 2k on v7x.
    # TODO(synk): lane-dense output packing for dh < 128 (avoids masked vst).


def attention(q, k, v, *, vmem_budget=20 * 1024 * 1024, target_steps=8):
    """q, k, v: (B*H, S, dh) -> context (B*H, S, dh)."""
    BH, S, dh = q.shape
    dsz = q.dtype.itemsize
    # Per-slice live VMEM: scores + probs (f32), attn temp (input dtype),
    # q/k/v input blocks + output block (all double-buffered), ctx f32.
    per_slice = S * S * (4 + 4 + dsz) + S * dh * (8 * dsz + 4)
    hb_budget = max(1, vmem_budget // max(per_slice, 1))
    # Keep enough grid steps for DMA/compute overlap and megacore sharding.
    hb_cap = max(1, BH // target_steps)
    hb = int(max(1, min(BH, hb_budget, hb_cap)))
    while BH % hb != 0:
        hb -= 1
    spec = pl.BlockSpec((hb, S, dh), lambda i: (i, 0, 0))
    return pl.pallas_call(
        _attn_kernel,
        grid=(BH // hb,),
        in_specs=[spec, spec, spec],
        out_specs=spec,
        out_shape=jax.ShapeDtypeStruct((BH, S, dh), q.dtype),
        compiler_params=pltpu.CompilerParams(
            dimension_semantics=("parallel",),
            vmem_limit_bytes=_VMEM_LIMIT),
    )(q, k, v)


# ----------------------------------------------------------------------------
# Encoder forward (glue in plain JAX: free contiguous reshapes only)
# ----------------------------------------------------------------------------

@functools.partial(jax.jit, static_argnums=(2,))
def encoder_forward(x, fp, num_head):
    B, S, D = x.shape
    dh = D // num_head
    dtype = fp["wqkv"].dtype
    x2d = x.reshape(B * S, D).astype(dtype)

    # --- MultiHeadAttention ---
    # One matmul against the pre-stacked (3, D, D) weight; Q/K/V come out as
    # contiguous (B*S, D) slabs, so the quirky torch-style views are free.
    qkv = qkv_projection(x2d, fp["wqkv"], fp["bqkv"])         # (3, B*S, D)
    # Matches torch's .view(B*num_head, -1, dim_head) (row-major, no transpose).
    Qh = qkv[0].reshape(B * num_head, -1, dh)
    Kh = qkv[1].reshape(B * num_head, -1, dh)
    Vh = qkv[2].reshape(B * num_head, -1, dh)

    ctx = attention(Qh, Kh, Vh)
    ctx2d = ctx.reshape(B * S, D)          # matches .view(B, -1, dh*num_head)

    # Output projection + dropout(p=0)=identity + residual + LayerNorm (fused).
    mha_out = matmul_bias_residual_layernorm(
        ctx2d, fp["wo"], fp["bo"], x2d, fp["ln1_g"], fp["ln1_b"])

    # --- Position-wise Feed Forward ---
    h = matmul_bias(mha_out, fp["w1"], fp["b1"], relu=True)
    ffn_out = matmul_bias_residual_layernorm(
        h, fp["w2"], fp["b2"], mha_out, fp["ln2_g"], fp["ln2_b"])

    return ffn_out.reshape(B, S, D)


# ----------------------------------------------------------------------------
# Pure-JAX reference (mirrors the PyTorch forward) for correctness checking
# ----------------------------------------------------------------------------

def encoder_reference(x, params, num_head):
    B, S, D = x.shape
    dh = D // num_head

    def lin(z, w, b):
        return z @ w + b[0]

    x2d = x.reshape(B * S, D)
    Q = lin(x2d, params["wq"], params["bq"]).reshape(B * num_head, -1, dh)
    K = lin(x2d, params["wk"], params["bk"]).reshape(B * num_head, -1, dh)
    V = lin(x2d, params["wv"], params["bv"]).reshape(B * num_head, -1, dh)
    scale = float(dh) ** -0.5
    s = jnp.einsum("bqd,bkd->bqk", Q, K) * scale
    attn = jax.nn.softmax(s, axis=-1)
    ctx = jnp.einsum("bqk,bkd->bqd", attn, V).reshape(B * S, D)
    out = lin(ctx, params["wo"], params["bo"]) + x2d

    def ln(z, g, b):
        m = z.mean(-1, keepdims=True)
        v = ((z - m) ** 2).mean(-1, keepdims=True)
        return (z - m) / jnp.sqrt(v + 1e-5) * g[0] + b[0]

    out = ln(out, params["ln1_g"], params["ln1_b"])
    h = jax.nn.relu(lin(out, params["w1"], params["b1"]))
    h2 = lin(h, params["w2"], params["b2"]) + out
    return ln(h2, params["ln2_g"], params["ln2_b"]).reshape(B, S, D)


# ----------------------------------------------------------------------------
# Parameter construction + one-time fusion/pre-scaling (outside jit)
# ----------------------------------------------------------------------------

def make_params(key, dim_model, num_head, hidden):
    ks = jax.random.split(key, 6)

    def w(k, shape, scale):
        return jax.random.normal(k, shape, jnp.float32) * scale

    s_d = 1.0 / (dim_model ** 0.5)
    s_h = 1.0 / (hidden ** 0.5)
    return {
        # Linear weights stored pre-transposed as (In, Out); bias as (1, Out).
        "wq": w(ks[0], (dim_model, dim_model), s_d), "bq": jnp.zeros((1, dim_model), jnp.float32),
        "wk": w(ks[1], (dim_model, dim_model), s_d), "bk": jnp.zeros((1, dim_model), jnp.float32),
        "wv": w(ks[2], (dim_model, dim_model), s_d), "bv": jnp.zeros((1, dim_model), jnp.float32),
        "wo": w(ks[3], (dim_model, dim_model), s_d), "bo": jnp.full((1, dim_model), 0.01, jnp.float32),
        "ln1_g": jnp.ones((1, dim_model), jnp.float32), "ln1_b": jnp.zeros((1, dim_model), jnp.float32),
        "w1": w(ks[4], (dim_model, hidden), s_d), "b1": jnp.full((1, hidden), 0.02, jnp.float32),
        "w2": w(ks[5], (hidden, dim_model), s_h), "b2": jnp.zeros((1, dim_model), jnp.float32),
        "ln2_g": jnp.ones((1, dim_model), jnp.float32), "ln2_b": jnp.zeros((1, dim_model), jnp.float32),
    }


def prepare_fused_params(params, num_head, compute_dtype=jnp.float32):
    """Done ONCE (outside the jitted forward): stack QKV weights/biases and
    fold the 1/sqrt(dh) attention scale into the Q projection (in f32).
    Matmul weights optionally cast to bf16; biases + LN params stay f32
    (the kernels apply them in f32 epilogues)."""
    D = params["wq"].shape[0]
    dh = D // num_head
    scale = float(dh) ** -0.5
    wqkv = jnp.stack([params["wq"] * scale, params["wk"], params["wv"]], axis=0)   # (3, D, D)
    bqkv = jnp.stack([params["bq"] * scale, params["bk"], params["bv"]], axis=0)   # (3, 1, D)
    cd = compute_dtype
    return {
        "wqkv": wqkv.astype(cd), "bqkv": bqkv,
        "wo": params["wo"].astype(cd), "bo": params["bo"],
        "ln1_g": params["ln1_g"], "ln1_b": params["ln1_b"],
        "w1": params["w1"].astype(cd), "b1": params["b1"],
        "w2": params["w2"].astype(cd), "b2": params["b2"],
        "ln2_g": params["ln2_g"], "ln2_b": params["ln2_b"],
    }


if __name__ == "__main__":
    configs = [
        # (B, S, dim_model, num_head, hidden, compute_dtype, tol)
        (2, 8, 32, 4, 64, jnp.float32, 1e-3),       # tiny, matches the module's small-shape spec
        (2, 64, 256, 8, 1024, jnp.float32, 1e-3),   # multi-block N tiling + K accumulation
        (2, 64, 256, 8, 1024, jnp.bfloat16, 8e-2),  # bf16 MXU path (f32 accumulation)
    ]

    key = jax.random.PRNGKey(0)
    for (B, S, dim_model, num_head, hidden, cdtype, tol) in configs:
        key, kx, kp = jax.random.split(key, 3)
        x = jax.random.normal(kx, (B, S, dim_model), jnp.float32)
        params = make_params(kp, dim_model, num_head, hidden)
        fused = prepare_fused_params(params, num_head, compute_dtype=cdtype)

        out = encoder_forward(x.astype(cdtype), fused, num_head)
        out = jax.block_until_ready(out)

        ref = encoder_reference(x, params, num_head)
        out_f32 = out.astype(jnp.float32)
        assert out.shape == (B, S, dim_model)
        assert bool(jnp.all(jnp.isfinite(out_f32))), (
            f"non-finite output for config {(B, S, dim_model, num_head, hidden, cdtype)}")
        assert jnp.allclose(out_f32, ref, atol=tol, rtol=tol), (
            f"mismatch vs reference for config {(B, S, dim_model, num_head, hidden, cdtype)}")

    print("KERNEL_OK")
</pallas_src>

<mosaic_0001>
module attributes {stable_mosaic.version = 11 : i64} {
  func.func @_mm_bias_kernel(%arg0: i32, %arg1: i32, %arg2: i32, %arg3: i32, %arg4: memref<16x32xf32, #tpu.memory_space<vmem>>, %arg5: memref<1x32x32xf32, #tpu.memory_space<vmem>>, %arg6: memref<1x1x32xf32, #tpu.memory_space<vmem>>, %arg7: memref<1x16x32xf32, #tpu.memory_space<vmem>>, %arg8: memref<16x32xf32, #tpu.memory_space<vmem>>) attributes {dimension_semantics = [#tpu.dimension_semantics<parallel>, #tpu.dimension_semantics<parallel>, #tpu.dimension_semantics<parallel>, #tpu.dimension_semantics<arbitrary>], iteration_bounds = array<i64: 3, 1, 1, 1>, scalar_prefetch = 0 : i64, scratch_operands = 1 : i64, tpu.core_type = #tpu.core_type<tc>, window_params = [{transform_indices = @transform_0, window_bounds = array<i64: 16, 32>}, {transform_indices = @transform_1, window_bounds = array<i64: 1, 32, 32>}, {transform_indices = @transform_2, window_bounds = array<i64: 1, 1, 32>}, {transform_indices = @transform_3, window_bounds = array<i64: 1, 16, 32>}]} {
    %c0_i32 = arith.constant 0 : i32
    %0 = arith.cmpi eq, %arg3, %c0_i32 : i32
    %1 = arith.extui %0 : i1 to i32
    %c0_i32_0 = arith.constant 0 : i32
    %2 = arith.cmpi ne, %1, %c0_i32_0 : i32
    scf.if %2 {
      %cst_11 = arith.constant 0.000000e+00 : f32
      %13 = vector.broadcast %cst_11 : f32 to vector<16x32xf32>
      %c0_12 = arith.constant 0 : index
      %c0_13 = arith.constant 0 : index
      %14 = vector.load %arg8[%c0_12, %c0_13] : memref<16x32xf32, #tpu.memory_space<vmem>>, vector<16x32xf32>
      tpu.vector_store %arg8[%c0_12, %c0_13], %13 {strides = array<i32>} : memref<16x32xf32, #tpu.memory_space<vmem>>, vector<16x32xf32>,
    } else {
    }
    %c0 = arith.constant 0 : index
    %c0_1 = arith.constant 0 : index
    %3 = vector.load %arg8[%c0, %c0_1] : memref<16x32xf32, #tpu.memory_space<vmem>>, vector<16x32xf32>
    %c0_2 = arith.constant 0 : index
    %c0_3 = arith.constant 0 : index
    %4 = vector.load %arg4[%c0_2, %c0_3] : memref<16x32xf32, #tpu.memory_space<vmem>>, vector<16x32xf32>
    %c0_4 = arith.constant 0 : index
    %c0_5 = arith.constant 0 : index
    %c0_6 = arith.constant 0 : index
    %5 = vector.load %arg5[%c0_4, %c0_5, %c0_6] : memref<1x32x32xf32, #tpu.memory_space<vmem>>, vector<1x32x32xf32>
    %6 = vector.shape_cast %5 : vector<1x32x32xf32> to vector<32x32xf32>
    %cst = arith.constant dense<0.000000e+00> : vector<16x32xf32>
    %7 = tpu.matmul %4, %6, %cst {dimension_numbers = #tpu.dot_dimension_numbers<[1], [0], [0], [1], [0, 0, 1, 1], [], []>} : vector<16x32xf32>, vector<32x32xf32>, vector<16x32xf32> -> vector<16x32xf32>
    %8 = arith.addf %3, %7 : vector<16x32xf32>
    %c0_7 = arith.constant 0 : index
    %c0_8 = arith.constant 0 : index
    %9 = vector.load %arg8[%c0_7, %c0_8] : memref<16x32xf32, #tpu.memory_space<vmem>>, vector<16x32xf32>
    tpu.vector_store %arg8[%c0_7, %c0_8], %8 {strides = array<i32>} : memref<16x32xf32, #tpu.memory_space<vmem>>, vector<16x32xf32>,
    %c0_i32_9 = arith.constant 0 : i32
    %10 = arith.cmpi eq, %arg3, %c0_i32_9 : i32
    %11 = arith.extui %10 : i1 to i32
    %c0_i32_10 = arith.constant 0 : i32
    %12 = arith.cmpi ne, %11, %c0_i32_10 : i32
    scf.if %12 {
      %c0_11 = arith.constant 0 : index
      %c0_12 = arith.constant 0 : index
      %13 = vector.load %arg8[%c0_11, %c0_12] : memref<16x32xf32, #tpu.memory_space<vmem>>, vector<16x32xf32>
      %c0_13 = arith.constant 0 : index
      %c0_14 = arith.constant 0 : index
      %c0_15 = arith.constant 0 : index
      %14 = vector.load %arg6[%c0_13, %c0_14, %c0_15] : memref<1x1x32xf32, #tpu.memory_space<vmem>>, vector<1x1x32xf32>
      %15 = vector.shape_cast %14 : vector<1x1x32xf32> to vector<1x32xf32>
      %16 = vector.broadcast %15 : vector<1x32xf32> to vector<16x32xf32>
      %17 = arith.addf %13, %16 : vector<16x32xf32>
      %c0_16 = arith.constant 0 : index
      %c0_17 = arith.constant 0 : index
      %c0_18 = arith.constant 0 : index
      %18 = vector.load %arg7[%c0_16, %c0_17, %c0_18] : memref<1x16x32xf32, #tpu.memory_space<vmem>>, vector<1x16x32xf32>
      %19 = vector.shape_cast %18 : vector<1x16x32xf32> to vector<16x32xf32>
      %20 = vector.shape_cast %17 : vector<16x32xf32> to vector<1x16x32xf32>
      tpu.vector_store %arg7[%c0_16, %c0_17, %c0_18], %20 {strides = array<i32>} : memref<1x16x32xf32, #tpu.memory_space<vmem>>, vector<1x16x32xf32>,
    } else {
    }
    return
  }
  func.func @transform_0(%arg0: i32, %arg1: i32, %arg2: i32, %arg3: i32) -> (i32, i32) {
    %c0_i32 = arith.constant 0 : i32
    return %arg1, %arg3 : i32, i32
  }
  func.func @transform_1(%arg0: i32, %arg1: i32, %arg2: i32, %arg3: i32) -> (i32, i32, i32) {
    %c0_i32 = arith.constant 0 : i32
    return %arg0, %arg3, %arg2 : i32, i32, i32
  }
  func.func @transform_2(%arg0: i32, %arg1: i32, %arg2: i32, %arg3: i32) -> (i32, i32, i32) {
    %c0_i32 = arith.constant 0 : i32
    %c0_i32_0 = arith.constant 0 : i32
    return %arg0, %c0_i32, %arg2 : i32, i32, i32
  }
  func.func @transform_3(%arg0: i32, %arg1: i32, %arg2: i32, %arg3: i32) -> (i32, i32, i32) {
    %c0_i32 = arith.constant 0 : i32
    return %arg0, %arg1, %arg2 : i32, i32, i32
  }
}

module attributes {stable_mosaic.version = 11 : i64} {
  func.func @_attn_kernel(%arg0: i32, %arg1: memref<1x8x8xf32, #tpu.memory_space<vmem>>, %arg2: memref<1x8x8xf32, #tpu.memory_space<vmem>>, %arg3: memref<1x8x8xf32, #tpu.memory_space<vmem>>, %arg4: memref<1x8x8xf32, #tpu.memory_space<vmem>>) attributes {dimension_semantics = [#tpu.dimension_semantics<parallel>], iteration_bounds = array<i64: 8>, scalar_prefetch = 0 : i64, scratch_operands = 0 : i64, tpu.core_type = #tpu.core_type<tc>, window_params = [{transform_indices = @transform_0, window_bounds = array<i64: 1, 8, 8>}, {transform_indices = @transform_1, window_bounds = array<i64: 1, 8, 8>}, {transform_indices = @transform_2, window_bounds = array<i64: 1, 8, 8>}, {transform_indices = @transform_3, window_bounds = array<i64: 1, 8, 8>}]} {
    %c0 = arith.constant 0 : index
    %c0_0 = arith.constant 0 : index
    %c0_1 = arith.constant 0 : index
    %0 = vector.load %arg1[%c0, %c0_0, %c0_1] : memref<1x8x8xf32, #tpu.memory_space<vmem>>, vector<1x8x8xf32>
    %c0_2 = arith.constant 0 : index
    %c0_3 = arith.constant 0 : index
    %c0_4 = arith.constant 0 : index
    %1 = vector.load %arg2[%c0_2, %c0_3, %c0_4] : memref<1x8x8xf32, #tpu.memory_space<vmem>>, vector<1x8x8xf32>
    %c0_5 = arith.constant 0 : index
    %c0_6 = arith.constant 0 : index
    %c0_7 = arith.constant 0 : index
    %2 = vector.load %arg3[%c0_5, %c0_6, %c0_7] : memref<1x8x8xf32, #tpu.memory_space<vmem>>, vector<1x8x8xf32>
    "tpu.trace_start"() <{level = 10 : i32, message = "hqd,hkd->hqk"}> : () -> ()
    %cst = arith.constant dense<0.000000e+00> : vector<1x8x8xf32>
    %3 = tpu.matmul %0, %1, %cst {dimension_numbers = #tpu.dot_dimension_numbers<[2], [2], [1], [1], [0, 0, 0, 1, 1, 1], [0], [0]>} : vector<1x8x8xf32>, vector<1x8x8xf32>, vector<1x8x8xf32> -> vector<1x8x8xf32>
    "tpu.trace_stop"() : () -> ()
    %cst_8 = arith.constant dense<0xFF800000> : vector<1x8xf32>
    %4 = vector.multi_reduction <maximumf>, %3, %cst_8 [2] : vector<1x8x8xf32> to vector<1x8xf32>
    %5 = vector.shape_cast %4 : vector<1x8xf32> to vector<1x8x1xf32>
    %6 = vector.broadcast %5 : vector<1x8x1xf32> to vector<1x8x8xf32>
    %7 = arith.subf %3, %6 : vector<1x8x8xf32>
    %8 = math.exp %7 : vector<1x8x8xf32>
    %cst_9 = arith.constant dense<0.000000e+00> : vector<1x8xf32>
    %9 = vector.multi_reduction <add>, %8, %cst_9 [2] : vector<1x8x8xf32> to vector<1x8xf32>
    %10 = vector.shape_cast %9 : vector<1x8xf32> to vector<1x8x1xf32>
    %11 = tpu.reciprocal %10 {approx = true} : vector<1x8x1xf32> -> vector<1x8x1xf32>
    %12 = arith.mulf %10, %11 : vector<1x8x1xf32>
    %cst_10 = arith.constant 2.000000e+00 : f32
    %13 = vector.broadcast %cst_10 : f32 to vector<1x8x1xf32>
    %14 = arith.subf %13, %12 : vector<1x8x1xf32>
    %15 = arith.mulf %11, %14 : vector<1x8x1xf32>
    %16 = vector.broadcast %15 : vector<1x8x1xf32> to vector<1x8x8xf32>
    %17 = arith.mulf %8, %16 : vector<1x8x8xf32>
    "tpu.trace_start"() <{level = 10 : i32, message = "hqk,hkd->hqd"}> : () -> ()
    %cst_11 = arith.constant dense<0.000000e+00> : vector<1x8x8xf32>
    %18 = tpu.matmul %17, %2, %cst_11 {dimension_numbers = #tpu.dot_dimension_numbers<[2], [1], [1], [2], [0, 0, 0, 1, 1, 2], [0], [0]>} : vector<1x8x8xf32>, vector<1x8x8xf32>, vector<1x8x8xf32> -> vector<1x8x8xf32>
    "tpu.trace_stop"() : () -> ()
    %c0_12 = arith.constant 0 : index
    %c0_13 = arith.constant 0 : index
    %c0_14 = arith.constant 0 : index
    %19 = vector.load %arg4[%c0_12, %c0_13, %c0_14] : memref<1x8x8xf32, #tpu.memory_space<vmem>>, vector<1x8x8xf32>
    tpu.vector_store %arg4[%c0_12, %c0_13, %c0_14], %18 {strides = array<i32>} : memref<1x8x8xf32, #tpu.memory_space<vmem>>, vector<1x8x8xf32>,
    return
  }
  func.func @transform_0(%arg0: i32) -> (i32, i32, i32) {
    %c0_i32 = arith.constant 0 : i32
    %c0_i32_0 = arith.constant 0 : i32
    %c0_i32_1 = arith.constant 0 : i32
    return %arg0, %c0_i32, %c0_i32_0 : i32, i32, i32
  }
  func.func @transform_1(%arg0: i32) -> (i32, i32, i32) {
    %c0_i32 = arith.constant 0 : i32
    %c0_i32_0 = arith.constant 0 : i32
    %c0_i32_1 = arith.constant 0 : i32
    return %arg0, %c0_i32, %c0_i32_0 : i32, i32, i32
  }
  func.func @transform_2(%arg0: i32) -> (i32, i32, i32) {
    %c0_i32 = arith.constant 0 : i32
    %c0_i32_0 = arith.constant 0 : i32
    %c0_i32_1 = arith.constant 0 : i32
    return %arg0, %c0_i32, %c0_i32_0 : i32, i32, i32
  }
  func.func @transform_3(%arg0: i32) -> (i32, i32, i32) {
    %c0_i32 = arith.constant 0 : i32
    %c0_i32_0 = arith.constant 0 : i32
    %c0_i32_1 = arith.constant 0 : i32
    return %arg0, %c0_i32, %c0_i32_0 : i32, i32, i32
  }
}

module attributes {stable_mosaic.version = 11 : i64} {
  func.func @_mm_bias_kernel(%arg0: i32, %arg1: i32, %arg2: i32, %arg3: memref<16x32xf32, #tpu.memory_space<vmem>>, %arg4: memref<32x64xf32, #tpu.memory_space<vmem>>, %arg5: memref<1x64xf32, #tpu.memory_space<vmem>>, %arg6: memref<16x64xf32, #tpu.memory_space<vmem>>, %arg7: memref<16x64xf32, #tpu.memory_space<vmem>>) attributes {dimension_semantics = [#tpu.dimension_semantics<parallel>, #tpu.dimension_semantics<parallel>, #tpu.dimension_semantics<arbitrary>], iteration_bounds = array<i64: 1, 1, 1>, scalar_prefetch = 0 : i64, scratch_operands = 1 : i64, tpu.core_type = #tpu.core_type<tc>, window_params = [{transform_indices = @transform_0, window_bounds = array<i64: 16, 32>}, {transform_indices = @transform_1, window_bounds = array<i64: 32, 64>}, {transform_indices = @transform_2, window_bounds = array<i64: 1, 64>}, {transform_indices = @transform_3, window_bounds = array<i64: 16, 64>}]} {
    %c0_i32 = arith.constant 0 : i32
    %0 = arith.cmpi eq, %arg2, %c0_i32 : i32
    %1 = arith.extui %0 : i1 to i32
    %c0_i32_0 = arith.constant 0 : i32
    %2 = arith.cmpi ne, %1, %c0_i32_0 : i32
    scf.if %2 {
      %cst_10 = arith.constant 0.000000e+00 : f32
      %12 = vector.broadcast %cst_10 : f32 to vector<16x64xf32>
      %c0_11 = arith.constant 0 : index
      %c0_12 = arith.constant 0 : index
      %13 = vector.load %arg7[%c0_11, %c0_12] : memref<16x64xf32, #tpu.memory_space<vmem>>, vector<16x64xf32>
      tpu.vector_store %arg7[%c0_11, %c0_12], %12 {strides = array<i32>} : memref<16x64xf32, #tpu.memory_space<vmem>>, vector<16x64xf32>,
    } else {
    }
    %c0 = arith.constant 0 : index
    %c0_1 = arith.constant 0 : index
    %3 = vector.load %arg7[%c0, %c0_1] : memref<16x64xf32, #tpu.memory_space<vmem>>, vector<16x64xf32>
    %c0_2 = arith.constant 0 : index
    %c0_3 = arith.constant 0 : index
    %4 = vector.load %arg3[%c0_2, %c0_3] : memref<16x32xf32, #tpu.memory_space<vmem>>, vector<16x32xf32>
    %c0_4 = arith.constant 0 : index
    %c0_5 = arith.constant 0 : index
    %5 = vector.load %arg4[%c0_4, %c0_5] : memref<32x64xf32, #tpu.memory_space<vmem>>, vector<32x64xf32>
    %cst = arith.constant dense<0.000000e+00> : vector<16x64xf32>
    %6 = tpu.matmul %4, %5, %cst {dimension_numbers = #tpu.dot_dimension_numbers<[1], [0], [0], [1], [0, 0, 1, 1], [], []>} : vector<16x32xf32>, vector<32x64xf32>, vector<16x64xf32> -> vector<16x64xf32>
    %7 = arith.addf %3, %6 : vector<16x64xf32>
    %c0_6 = arith.constant 0 : index
    %c0_7 = arith.constant 0 : index
    %8 = vector.load %arg7[%c0_6, %c0_7] : memref<16x64xf32, #tpu.memory_space<vmem>>, vector<16x64xf32>
    tpu.vector_store %arg7[%c0_6, %c0_7], %7 {strides = array<i32>} : memref<16x64xf32, #tpu.memory_space<vmem>>, vector<16x64xf32>,
    %c0_i32_8 = arith.constant 0 : i32
    %9 = arith.cmpi eq, %arg2, %c0_i32_8 : i32
    %10 = arith.extui %9 : i1 to i32
    %c0_i32_9 = arith.constant 0 : i32
    %11 = arith.cmpi ne, %10, %c0_i32_9 : i32
    scf.if %11 {
      %c0_10 = arith.constant 0 : index
      %c0_11 = arith.constant 0 : index
      %12 = vector.load %arg7[%c0_10, %c0_11] : memref<16x64xf32, #tpu.memory_space<vmem>>, vector<16x64xf32>
      %c0_12 = arith.constant 0 : index
      %c0_13 = arith.constant 0 : index
      %13 = vector.load %arg5[%c0_12, %c0_13] : memref<1x64xf32, #tpu.memory_space<vmem>>, vector<1x64xf32>
      %14 = vector.broadcast %13 : vector<1x64xf32> to vector<16x64xf32>
      %15 = arith.addf %12, %14 : vector<16x64xf32>
      %cst_14 = arith.constant 0.000000e+00 : f32
      %16 = vector.broadcast %cst_14 : f32 to vector<16x64xf32>
      %17 = arith.maximumf %15, %16 : vector<16x64xf32>
      %c0_15 = arith.constant 0 : index
      %c0_16 = arith.constant 0 : index
      %18 = vector.load %arg6[%c0_15, %c0_16] : memref<16x64xf32, #tpu.memory_space<vmem>>, vector<16x64xf32>
      tpu.vector_store %arg6[%c0_15, %c0_16], %17 {strides = array<i32>} : memref<16x64xf32, #tpu.memory_space<vmem>>, vector<16x64xf32>,
    } else {
    }
    return
  }
  func.func @transform_0(%arg0: i32, %arg1: i32, %arg2: i32) -> (i32, i32) {
    %c0_i32 = arith.constant 0 : i32
    return %arg0, %arg2 : i32, i32
  }
  func.func @transform_1(%arg0: i32, %arg1: i32, %arg2: i32) -> (i32, i32) {
    %c0_i32 = arith.constant 0 : i32
    return %arg2, %arg1 : i32, i32
  }
  func.func @transform_2(%arg0: i32, %arg1: i32, %arg2: i32) -> (i32, i32) {
    %c0_i32 = arith.constant 0 : i32
    %c0_i32_0 = arith.constant 0 : i32
    return %c0_i32, %arg1 : i32, i32
  }
  func.func @transform_3(%arg0: i32, %arg1: i32, %arg2: i32) -> (i32, i32) {
    %c0_i32 = arith.constant 0 : i32
    return %arg0, %arg1 : i32, i32
  }
}

module attributes {stable_mosaic.version = 11 : i64} {
  func.func @_mm_bias_res_ln_kernel(%arg0: i32, %arg1: i32, %arg2: memref<16x32xf32, #tpu.memory_space<vmem>>, %arg3: memref<32x32xf32, #tpu.memory_space<vmem>>, %arg4: memref<1x32xf32, #tpu.memory_space<vmem>>, %arg5: memref<16x32xf32, #tpu.memory_space<vmem>>, %arg6: memref<1x32xf32, #tpu.memory_space<vmem>>, %arg7: memref<1x32xf32, #tpu.memory_space<vmem>>, %arg8: memref<16x32xf32, #tpu.memory_space<vmem>>, %arg9: memref<16x32xf32, #tpu.memory_space<vmem>>) attributes {dimension_semantics = [#tpu.dimension_semantics<parallel>, #tpu.dimension_semantics<arbitrary>], iteration_bounds = array<i64: 1, 1>, scalar_prefetch = 0 : i64, scratch_operands = 1 : i64, tpu.core_type = #tpu.core_type<tc>, window_params = [{transform_indices = @transform_0, window_bounds = array<i64: 16, 32>}, {transform_indices = @transform_1, window_bounds = array<i64: 32, 32>}, {pipeline_mode = #tpu.pipeline_mode<synchronous>, transform_indices = @transform_2, window_bounds = array<i64: 1, 32>}, {transform_indices = @transform_3, window_bounds = array<i64: 16, 32>}, {pipeline_mode = #tpu.pipeline_mode<synchronous>, transform_indices = @transform_4, window_bounds = array<i64: 1, 32>}, {pipeline_mode = #tpu.pipeline_mode<synchronous>, transform_indices = @transform_5, window_bounds = array<i64: 1, 32>}, {transform_indices = @transform_6, window_bounds = array<i64: 16, 32>}]} {
    %c0_i32 = arith.constant 0 : i32
    %0 = arith.cmpi eq, %arg1, %c0_i32 : i32
    %1 = arith.extui %0 : i1 to i32
    %c0_i32_0 = arith.constant 0 : i32
    %2 = arith.cmpi ne, %1, %c0_i32_0 : i32
    scf.if %2 {
      %cst_10 = arith.constant 0.000000e+00 : f32
      %12 = vector.broadcast %cst_10 : f32 to vector<16x32xf32>
      %c0_11 = arith.constant 0 : index
      %c0_12 = arith.constant 0 : index
      %13 = vector.load %arg9[%c0_11, %c0_12] : memref<16x32xf32, #tpu.memory_space<vmem>>, vector<16x32xf32>
      tpu.vector_store %arg9[%c0_11, %c0_12], %12 {strides = array<i32>} : memref<16x32xf32, #tpu.memory_space<vmem>>, vector<16x32xf32>,
    } else {
    }
    %c0 = arith.constant 0 : index
    %c0_1 = arith.constant 0 : index
    %3 = vector.load %arg9[%c0, %c0_1] : memref<16x32xf32, #tpu.memory_space<vmem>>, vector<16x32xf32>
    %c0_2 = arith.constant 0 : index
    %c0_3 = arith.constant 0 : index
    %4 = vector.load %arg2[%c0_2, %c0_3] : memref<16x32xf32, #tpu.memory_space<vmem>>, vector<16x32xf32>
    %c0_4 = arith.constant 0 : index
    %c0_5 = arith.constant 0 : index
    %5 = vector.load %arg3[%c0_4, %c0_5] : memref<32x32xf32, #tpu.memory_space<vmem>>, vector<32x32xf32>
    %cst = arith.constant dense<0.000000e+00> : vector<16x32xf32>
    %6 = tpu.matmul %4, %5, %cst {dimension_numbers = #tpu.dot_dimension_numbers<[1], [0], [0], [1], [0, 0, 1, 1], [], []>} : vector<16x32xf32>, vector<32x32xf32>, vector<16x32xf32> -> vector<16x32xf32>
    %7 = arith.addf %3, %6 : vector<16x32xf32>
    %c0_6 = arith.constant 0 : index
    %c0_7 = arith.constant 0 : index
    %8 = vector.load %arg9[%c0_6, %c0_7] : memref<16x32xf32, #tpu.memory_space<vmem>>, vector<16x32xf32>
    tpu.vector_store %arg9[%c0_6, %c0_7], %7 {strides = array<i32>} : memref<16x32xf32, #tpu.memory_space<vmem>>, vector<16x32xf32>,
    %c0_i32_8 = arith.constant 0 : i32
    %9 = arith.cmpi eq, %arg1, %c0_i32_8 : i32
    %10 = arith.extui %9 : i1 to i32
    %c0_i32_9 = arith.constant 0 : i32
    %11 = arith.cmpi ne, %10, %c0_i32_9 : i32
    scf.if %11 {
      %c0_10 = arith.constant 0 : index
      %c0_11 = arith.constant 0 : index
      %12 = vector.load %arg9[%c0_10, %c0_11] : memref<16x32xf32, #tpu.memory_space<vmem>>, vector<16x32xf32>
      %c0_12 = arith.constant 0 : index
      %c0_13 = arith.constant 0 : index
      %13 = vector.load %arg4[%c0_12, %c0_13] : memref<1x32xf32, #tpu.memory_space<vmem>>, vector<1x32xf32>
      %14 = vector.broadcast %13 : vector<1x32xf32> to vector<16x32xf32>
      %15 = arith.addf %12, %14 : vector<16x32xf32>
      %c0_14 = arith.constant 0 : index
      %c0_15 = arith.constant 0 : index
      %16 = vector.load %arg5[%c0_14, %c0_15] : memref<16x32xf32, #tpu.memory_space<vmem>>, vector<16x32xf32>
      %17 = arith.addf %15, %16 : vector<16x32xf32>
      %cst_16 = arith.constant dense<0.000000e+00> : vector<16xf32>
      %18 = vector.multi_reduction <add>, %17, %cst_16 [1] : vector<16x32xf32> to vector<16xf32>
      %19 = vector.shape_cast %18 : vector<16xf32> to vector<16x1xf32>
      %cst_17 = arith.constant 3.200000e+01 : f32
      %20 = vector.broadcast %cst_17 : f32 to vector<16x1xf32>
      %21 = arith.divf %19, %20 : vector<16x1xf32>
      %22 = vector.broadcast %21 : vector<16x1xf32> to vector<16x32xf32>
      %23 = arith.subf %17, %22 : vector<16x32xf32>
      %24 = arith.mulf %23, %23 : vector<16x32xf32>
      %cst_18 = arith.constant dense<0.000000e+00> : vector<16xf32>
      %25 = vector.multi_reduction <add>, %24, %cst_18 [1] : vector<16x32xf32> to vector<16xf32>
      %26 = vector.shape_cast %25 : vector<16xf32> to vector<16x1xf32>
      %cst_19 = arith.constant 3.200000e+01 : f32
      %27 = vector.broadcast %cst_19 : f32 to vector<16x1xf32>
      %28 = arith.divf %26, %27 : vector<16x1xf32>
      %cst_20 = arith.constant 9.99999974E-6 : f32
      %29 = vector.broadcast %cst_20 : f32 to vector<16x1xf32>
      %30 = arith.addf %28, %29 : vector<16x1xf32>
      %31 = math.rsqrt %30 : vector<16x1xf32>
      %32 = vector.broadcast %31 : vector<16x1xf32> to vector<16x32xf32>
      %33 = arith.mulf %23, %32 : vector<16x32xf32>
      %c0_21 = arith.constant 0 : index
      %c0_22 = arith.constant 0 : index
      %34 = vector.load %arg6[%c0_21, %c0_22] : memref<1x32xf32, #tpu.memory_space<vmem>>, vector<1x32xf32>
      %35 = vector.broadcast %34 : vector<1x32xf32> to vector<16x32xf32>
      %36 = arith.mulf %33, %35 : vector<16x32xf32>
      %c0_23 = arith.constant 0 : index
      %c0_24 = arith.constant 0 : index
      %37 = vector.load %arg7[%c0_23, %c0_24] : memref<1x32xf32, #tpu.memory_space<vmem>>, vector<1x32xf32>
      %38 = vector.broadcast %37 : vector<1x32xf32> to vector<16x32xf32>
      %39 = arith.addf %36, %38 : vector<16x32xf32>
      %c0_25 = arith.constant 0 : index
      %c0_26 = arith.constant 0 : index
      %40 = vector.load %arg8[%c0_25, %c0_26] : memref<16x32xf32, #tpu.memory_space<vmem>>, vector<16x32xf32>
      tpu.vector_store %arg8[%c0_25, %c0_26], %39 {strides = array<i32>} : memref<16x32xf32, #tpu.memory_space<vmem>>, vector<16x32xf32>,
    } else {
    }
    return
  }
  func.func @transform_0(%arg0: i32, %arg1: i32) -> (i32, i32) {
    %c0_i32 = arith.constant 0 : i32
    return %arg0, %arg1 : i32, i32
  }
  func.func @transform_1(%arg0: i32, %arg1: i32) -> (i32, i32) {
    %c0_i32 = arith.constant 0 : i32
    %c0_i32_0 = arith.constant 0 : i32
    return %arg1, %c0_i32 : i32, i32
  }
  func.func @transform_2(%arg0: i32, %arg1: i32) -> (i32, i32) {
    %c0_i32 = arith.constant 0 : i32
    %c0_i32_0 = arith.constant 0 : i32
    %c0_i32_1 = arith.constant 0 : i32
    return %c0_i32, %c0_i32_0 : i32, i32
  }
  func.func @transform_3(%arg0: i32, %arg1: i32) -> (i32, i32) {
    %c0_i32 = arith.constant 0 : i32
    %c0_i32_0 = arith.constant 0 : i32
    return %arg0, %c0_i32 : i32, i32
  }
  func.func @transform_4(%arg0: i32, %arg1: i32) -> (i32, i32) {
    %c0_i32 = arith.constant 0 : i32
    %c0_i32_0 = arith.constant 0 : i32
    %c0_i32_1 = arith.constant 0 : i32
    return %c0_i32, %c0_i32_0 : i32, i32
  }
  func.func @transform_5(%arg0: i32, %arg1: i32) -> (i32, i32) {
    %c0_i32 = arith.constant 0 : i32
    %c0_i32_0 = arith.constant 0 : i32
    %c0_i32_1 = arith.constant 0 : i32
    return %c0_i32, %c0_i32_0 : i32, i32
  }
  func.func @transform_6(%arg0: i32, %arg1: i32) -> (i32, i32) {
    %c0_i32 = arith.constant 0 : i32
    %c0_i32_0 = arith.constant 0 : i32
    return %arg0, %c0_i32 : i32, i32
  }
}

module attributes {stable_mosaic.version = 11 : i64} {
  func.func @_mm_bias_res_ln_kernel(%arg0: i32, %arg1: i32, %arg2: memref<16x64xf32, #tpu.memory_space<vmem>>, %arg3: memref<64x32xf32, #tpu.memory_space<vmem>>, %arg4: memref<1x32xf32, #tpu.memory_space<vmem>>, %arg5: memref<16x32xf32, #tpu.memory_space<vmem>>, %arg6: memref<1x32xf32, #tpu.memory_space<vmem>>, %arg7: memref<1x32xf32, #tpu.memory_space<vmem>>, %arg8: memref<16x32xf32, #tpu.memory_space<vmem>>, %arg9: memref<16x32xf32, #tpu.memory_space<vmem>>) attributes {dimension_semantics = [#tpu.dimension_semantics<parallel>, #tpu.dimension_semantics<arbitrary>], iteration_bounds = array<i64: 1, 1>, scalar_prefetch = 0 : i64, scratch_operands = 1 : i64, tpu.core_type = #tpu.core_type<tc>, window_params = [{transform_indices = @transform_0, window_bounds = array<i64: 16, 64>}, {transform_indices = @transform_1, window_bounds = array<i64: 64, 32>}, {pipeline_mode = #tpu.pipeline_mode<synchronous>, transform_indices = @transform_2, window_bounds = array<i64: 1, 32>}, {transform_indices = @transform_3, window_bounds = array<i64: 16, 32>}, {pipeline_mode = #tpu.pipeline_mode<synchronous>, transform_indices = @transform_4, window_bounds = array<i64: 1, 32>}, {pipeline_mode = #tpu.pipeline_mode<synchronous>, transform_indices = @transform_5, window_bounds = array<i64: 1, 32>}, {transform_indices = @transform_6, window_bounds = array<i64: 16, 32>}]} {
    %c0_i32 = arith.constant 0 : i32
    %0 = arith.cmpi eq, %arg1, %c0_i32 : i32
    %1 = arith.extui %0 : i1 to i32
    %c0_i32_0 = arith.constant 0 : i32
    %2 = arith.cmpi ne, %1, %c0_i32_0 : i32
    scf.if %2 {
      %cst_10 = arith.constant 0.000000e+00 : f32
      %12 = vector.broadcast %cst_10 : f32 to vector<16x32xf32>
      %c0_11 = arith.constant 0 : index
      %c0_12 = arith.constant 0 : index
      %13 = vector.load %arg9[%c0_11, %c0_12] : memref<16x32xf32, #tpu.memory_space<vmem>>, vector<16x32xf32>
      tpu.vector_store %arg9[%c0_11, %c0_12], %12 {strides = array<i32>} : memref<16x32xf32, #tpu.memory_space<vmem>>, vector<16x32xf32>,
    } else {
    }
    %c0 = arith.constant 0 : index
    %c0_1 = arith.constant 0 : index
    %3 = vector.load %arg9[%c0, %c0_1] : memref<16x32xf32, #tpu.memory_space<vmem>>, vector<16x32xf32>
    %c0_2 = arith.constant 0 : index
    %c0_3 = arith.constant 0 : index
    %4 = vector.load %arg2[%c0_2, %c0_3] : memref<16x64xf32, #tpu.memory_space<vmem>>, vector<16x64xf32>
    %c0_4 = arith.constant 0 : index
    %c0_5 = arith.constant 0 : index
    %5 = vector.load %arg3[%c0_4, %c0_5] : memref<64x32xf32, #tpu.memory_space<vmem>>, vector<64x32xf32>
    %cst = arith.constant dense<0.000000e+00> : vector<16x32xf32>
    %6 = tpu.matmul %4, %5, %cst {dimension_numbers = #tpu.dot_dimension_numbers<[1], [0], [0], [1], [0, 0, 1, 1], [], []>} : vector<16x64xf32>, vector<64x32xf32>, vector<16x32xf32> -> vector<16x32xf32>
    %7 = arith.addf %3, %6 : vector<16x32xf32>
    %c0_6 = arith.constant 0 : index
    %c0_7 = arith.constant 0 : index
    %8 = vector.load %arg9[%c0_6, %c0_7] : memref<16x32xf32, #tpu.memory_space<vmem>>, vector<16x32xf32>
    tpu.vector_store %arg9[%c0_6, %c0_7], %7 {strides = array<i32>} : memref<16x32xf32, #tpu.memory_space<vmem>>, vector<16x32xf32>,
    %c0_i32_8 = arith.constant 0 : i32
    %9 = arith.cmpi eq, %arg1, %c0_i32_8 : i32
    %10 = arith.extui %9 : i1 to i32
    %c0_i32_9 = arith.constant 0 : i32
    %11 = arith.cmpi ne, %10, %c0_i32_9 : i32
    scf.if %11 {
      %c0_10 = arith.constant 0 : index
      %c0_11 = arith.constant 0 : index
      %12 = vector.load %arg9[%c0_10, %c0_11] : memref<16x32xf32, #tpu.memory_space<vmem>>, vector<16x32xf32>
      %c0_12 = arith.constant 0 : index
      %c0_13 = arith.constant 0 : index
      %13 = vector.load %arg4[%c0_12, %c0_13] : memref<1x32xf32, #tpu.memory_space<vmem>>, vector<1x32xf32>
      %14 = vector.broadcast %13 : vector<1x32xf32> to vector<16x32xf32>
      %15 = arith.addf %12, %14 : vector<16x32xf32>
      %c0_14 = arith.constant 0 : index
      %c0_15 = arith.constant 0 : index
      %16 = vector.load %arg5[%c0_14, %c0_15] : memref<16x32xf32, #tpu.memory_space<vmem>>, vector<16x32xf32>
      %17 = arith.addf %15, %16 : vector<16x32xf32>
      %cst_16 = arith.constant dense<0.000000e+00> : vector<16xf32>
      %18 = vector.multi_reduction <add>, %17, %cst_16 [1] : vector<16x32xf32> to vector<16xf32>
      %19 = vector.shape_cast %18 : vector<16xf32> to vector<16x1xf32>
      %cst_17 = arith.constant 3.200000e+01 : f32
      %20 = vector.broadcast %cst_17 : f32 to vector<16x1xf32>
      %21 = arith.divf %19, %20 : vector<16x1xf32>
      %22 = vector.broadcast %21 : vector<16x1xf32> to vector<16x32xf32>
      %23 = arith.subf %17, %22 : vector<16x32xf32>
      %24 = arith.mulf %23, %23 : vector<16x32xf32>
      %cst_18 = arith.constant dense<0.000000e+00> : vector<16xf32>
      %25 = vector.multi_reduction <add>, %24, %cst_18 [1] : vector<16x32xf32> to vector<16xf32>
      %26 = vector.shape_cast %25 : vector<16xf32> to vector<16x1xf32>
      %cst_19 = arith.constant 3.200000e+01 : f32
      %27 = vector.broadcast %cst_19 : f32 to vector<16x1xf32>
      %28 = arith.divf %26, %27 : vector<16x1xf32>
      %cst_20 = arith.constant 9.99999974E-6 : f32
      %29 = vector.broadcast %cst_20 : f32 to vector<16x1xf32>
      %30 = arith.addf %28, %29 : vector<16x1xf32>
      %31 = math.rsqrt %30 : vector<16x1xf32>
      %32 = vector.broadcast %31 : vector<16x1xf32> to vector<16x32xf32>
      %33 = arith.mulf %23, %32 : vector<16x32xf32>
      %c0_21 = arith.constant 0 : index
      %c0_22 = arith.constant 0 : index
      %34 = vector.load %arg6[%c0_21, %c0_22] : memref<1x32xf32, #tpu.memory_space<vmem>>, vector<1x32xf32>
      %35 = vector.broadcast %34 : vector<1x32xf32> to vector<16x32xf32>
      %36 = arith.mulf %33, %35 : vector<16x32xf32>
      %c0_23 = arith.constant 0 : index
      %c0_24 = arith.constant 0 : index
      %37 = vector.load %arg7[%c0_23, %c0_24] : memref<1x32xf32, #tpu.memory_space<vmem>>, vector<1x32xf32>
      %38 = vector.broadcast %37 : vector<1x32xf32> to vector<16x32xf32>
      %39 = arith.addf %36, %38 : vector<16x32xf32>
      %c0_25 = arith.constant 0 : index
      %c0_26 = arith.constant 0 : index
      %40 = vector.load %arg8[%c0_25, %c0_26] : memref<16x32xf32, #tpu.memory_space<vmem>>, vector<16x32xf32>
      tpu.vector_store %arg8[%c0_25, %c0_26], %39 {strides = array<i32>} : memref<16x32xf32, #tpu.memory_space<vmem>>, vector<16x32xf32>,
    } else {
    }
    return
  }
  func.func @transform_0(%arg0: i32, %arg1: i32) -> (i32, i32) {
    %c0_i32 = arith.constant 0 : i32
    return %arg0, %arg1 : i32, i32
  }
  func.func @transform_1(%arg0: i32, %arg1: i32) -> (i32, i32) {
    %c0_i32 = arith.constant 0 : i32
    %c0_i32_0 = arith.constant 0 : i32
    return %arg1, %c0_i32 : i32, i32
  }
  func.func @transform_2(%arg0: i32, %arg1: i32) -> (i32, i32) {
    %c0_i32 = arith.constant 0 : i32
    %c0_i32_0 = arith.constant 0 : i32
    %c0_i32_1 = arith.constant 0 : i32
    return %c0_i32, %c0_i32_0 : i32, i32
  }
  func.func @transform_3(%arg0: i32, %arg1: i32) -> (i32, i32) {
    %c0_i32 = arith.constant 0 : i32
    %c0_i32_0 = arith.constant 0 : i32
    return %arg0, %c0_i32 : i32, i32
  }
  func.func @transform_4(%arg0: i32, %arg1: i32) -> (i32, i32) {
    %c0_i32 = arith.constant 0 : i32
    %c0_i32_0 = arith.constant 0 : i32
    %c0_i32_1 = arith.constant 0 : i32
    return %c0_i32, %c0_i32_0 : i32, i32
  }
  func.func @transform_5(%arg0: i32, %arg1: i32) -> (i32, i32) {
    %c0_i32 = arith.constant 0 : i32
    %c0_i32_0 = arith.constant 0 : i32
    %c0_i32_1 = arith.constant 0 : i32
    return %c0_i32, %c0_i32_0 : i32, i32
  }
  func.func @transform_6(%arg0: i32, %arg1: i32) -> (i32, i32) {
    %c0_i32 = arith.constant 0 : i32
    %c0_i32_0 = arith.constant 0 : i32
    return %arg0, %c0_i32 : i32, i32
  }
}

</mosaic_0001>

<llo_original>
// kernel: squeeze.5
$region0: #{squeeze.5}
  %s0 = inlined_call_operand.vmem [shape: f32[1,16,32], index: 0, kind: input, shape index: {}]
  %s1 = inlined_call_operand.vmem [shape: f32[8,8,8], index: 1, kind: output, shape index: {}]
  %v2 = vld [vmem:[%s0] sm:$0xff]
  %vm3 = vcmask 64512
  %4 = vst.msk [vmem:[%s1] ss:$4 sm:$0xff] %vm3, %v2
  %s5 = scalar_lea.vmem %s0, 8
  %v6 = vld [vmem:[%s5] sm:$0xff]
  %vm7 = vcmask 64512
  %s8 = scalar_lea.vmem %s1, 32
  %9 = vst.msk [vmem:[%s8] ss:$4 sm:$0xff] %vm7, %v6
  %v10 = vld [vmem:[%s0] sm:$0xff]
  %11 = vrot.lane.b32.xlu0 %v10, 120
  %v12 = vpop.permute.xlu0 %11
  %vm13 = vcmask 64512
  %s14 = scalar_lea.vmem %s1, 1
  %15 = vst.msk [vmem:[%s14] ss:$4 sm:$0xff] %vm13, %v12
  %s16 = scalar_lea.vmem %s0, 8
  %v17 = vld [vmem:[%s16] sm:$0xff]
  %18 = vrot.lane.b32.xlu0 %v17, 120
  %v19 = vpop.permute.xlu0 %18
  %vm20 = vcmask 64512
  %s21 = scalar_lea.vmem %s1, 33
  %22 = vst.msk [vmem:[%s21] ss:$4 sm:$0xff] %vm20, %v19
  %v23 = vld [vmem:[%s0] sm:$0xff]
  %24 = vrot.lane.b32.xlu0 %v23, 112
  %v25 = vpop.permute.xlu0 %24
  %vm26 = vcmask 64512
  %s27 = scalar_lea.vmem %s1, 2
  %28 = vst.msk [vmem:[%s27] ss:$4 sm:$0xff] %vm26, %v25
  %s29 = scalar_lea.vmem %s0, 8
  %v30 = vld [vmem:[%s29] sm:$0xff]
  %31 = vrot.lane.b32.xlu0 %v30, 112
  %v32 = vpop.permute.xlu0 %31
  %vm33 = vcmask 64512
  %s34 = scalar_lea.vmem %s1, 34
  %35 = vst.msk [vmem:[%s34] ss:$4 sm:$0xff] %vm33, %v32
  %v36 = vld [vmem:[%s0] sm:$0xff]
  %37 = vrot.lane.b32.xlu0 %v36, 104
  %v38 = vpop.permute.xlu0 %37
  %vm39 = vcmask 64512
  %s40 = scalar_lea.vmem %s1, 3
  %41 = vst.msk [vmem:[%s40] ss:$4 sm:$0xff] %vm39, %v38
  %s42 = scalar_lea.vmem %s0, 8
  %v43 = vld [vmem:[%s42] sm:$0xff]
  %44 = vrot.lane.b32.xlu0 %v43, 104
  %v45 = vpop.permute.xlu0 %44
  %vm46 = vcmask 64512
  %s47 = scalar_lea.vmem %s1, 35
  %48 = vst.msk [vmem:[%s47] ss:$4 sm:$0xff] %vm46, %v45

// kernel: encoder_forward.5
$region0: #{encoder_forward.5}
  #allocation0 [shape = 'u32[]', space=smem, size = 0x4, offset = 0x4, fixed_abs, tag = 'smem constant byte address 0x4 - core index']
  #allocation1 [shape = 'u32[144,128]{1,0:T(1,128)}', space=vmem, size = 0x12000, scoped, tag = 'internal scratch']
  #allocation2 [shape = 'f32[16,32]{1,0:T(8,128)}', space=vmem, size = 0x2000, scoped, tag = 'scratch operand']
  %s0 = inlined_call_operand.hbm [shape: f32[16,32], index: 0, kind: input, shape index: {}]
  %s1 = inlined_call_operand.hbm [shape: f32[3,32,32], index: 1, kind: input, shape index: {}]
  %s2 = inlined_call_operand.vmem [shape: f32[3,1,32], index: 2, kind: input, shape index: {}]
  %s3 = inlined_call_operand.vmem [shape: f32[3,16,32], index: 3, kind: output, shape index: {}]
  %s4 = sld [smem:[#allocation0]]
  $region61: #{encoder_forward.5} parent=0
    _
  %s6 = ssub.s32 1, %s4
  %s7 = scalar_select 0, %s6, %s4
  $region1: #{encoder_forward.5} parent=0
    #allocation3 [shape = 'u8[8192]{0}', space=vmem, size = 0x2000, scoped, tag = 'input window, operand 0, single buffered']
    #allocation4 [shape = 's32[2]{0}', space=sflag, size = 0x8, scoped, tag = 'scoped memory for encoder_forward.5']
    #allocation5 [shape = 'u8[32768]{0}', space=vmem, size = 0x8000, scoped, tag = 'input window, operand 1']
    #allocation6 [shape = 's32[2]{0}', space=sflag, size = 0x8, scoped, tag = 'scoped memory for encoder_forward.5']
    %8 = vsyncpa [#allocation4], 0
    %9 = vsyncpa [#allocation6], 0
    %s10 = scalar_lea.sflag [#allocation6], 1
    %11 = vsyncpa %s10, 0
    loop: start=0, step=1, limit=5
    $region2: #{encoder_forward.5} parent=1 // loop_pre_header
      _
    $region3: #{encoder_forward.5} parent=1 // loop_header
      %s13 = sphi 0, %s17
      %p14 = scmp.ge.s32.totalorder %s13, 5
      %s20 = sphi 0, %s46
      %s21 = sphi 0, %s42
      %s22 = sphi 0, %s38
      %s23 = sphi 0, %s34
      %s24 = sphi 0, %s20
      %s25 = sphi 0, %s21
      %s26 = sphi 0, %s22
      %s27 = sphi 0, %s23
      %s28 = sphi 0, %s24
      %s29 = sphi 0, %s25
      %s30 = sphi 0, %s26
      %s31 = sphi 0, %s27
      %s51 = sphi 0, %s53
      %s54 = sphi 0, %s51
      %s55 = sphi 0, %s54
      %s71 = sphi 0, %s55
      %s81 = sphi 0, %s83
      %s84 = sphi 0, %s81
      %s85 = sphi 0, %s84
      %s101 = sphi 0, %s85
      %s109 = sphi 0, %s111
      %s112 = sphi 0, %s109
      %s113 = sphi 0, %s112
      %s129 = sphi 0, %s113
      %s139 = sphi 0, %s141
      %s142 = sphi 0, %s139
      %s143 = sphi 0, %s142
      %s159 = sphi 0, %s143
    $region4: #{encoder_forward.5} parent=1 // loop_header_branch
      %16 = sbr.rel (%p14) target = $region8
    $region5: #{encoder_forward.5} parent=1 // loop_body
      %s18 = ssub.s32 %s13, 1
      %s19 = ssub.s32 %s13, 2
      %s32 = sadd.s32 1, %s23
      %p33 = scmp.ge.s32.totalorder %s32, 1
      %s34 = scalar_select %p33, 0, %s32
      %s35 = sadd.s32 1, %s22
      %s36 = scalar_select %p33, %s35, %s22
      %p37 = scmp.ge.s32.totalorder %s36, 1
      %s38 = scalar_select %p37, 0, %s36
      %s39 = sadd.s32 1, %s21
      %s40 = scalar_select %p37, %s39, %s21
      %p41 = scmp.ge.s32.totalorder %s40, 1
      %s42 = scalar_select %p41, 0, %s40
      %s43 = sadd.s32 1, %s20
      %s44 = scalar_select %p41, %s43, %s20
      %p45 = scmp.ge.s32.totalorder %s44, 3
      %s46 = scalar_select %p45, 0, %s44
      %s47 = ssub.s32 %s21, %s42
      %s48 = ssub.s32 %s23, %s34
      %s49 = sor.u32 %s47, %s48
      %p50 = scmp.eq.s32.totalorder %s49, 0
      %s52 = sadd.s32 %s51, 1
      %s53 = scalar_select %p50, %s51, %s52
      %p56 = pneg %p50
      %p57 = scmp.eq.s32.totalorder %s13, 2
      %p58 = por %p56, %p57
      %p59 = scmp.ne.s32.totalorder %s51, %s54
      %p60 = scmp.eq.s32.totalorder %s13, 0
      %p61 = por %p59, %p60
      %p62 = scmp.ne.s32.totalorder %s51, %s54
      %p63 = scmp.eq.s32.totalorder %s18, 2
      %p64 = por %p62, %p63
      %p65 = scmp.ne.s32.totalorder %s54, %s55
      %p66 = scmp.eq.s32.totalorder %s18, 0
      %p67 = por %p65, %p66
      %p68 = scmp.ne.s32.totalorder %s54, %s55
      %p69 = scmp.eq.s32.totalorder %s19, 2
      %p70 = por %p68, %p69
      %p72 = scmp.ne.s32.totalorder %s55, %s71
      %p73 = scmp.eq.s32.totalorder %s19, 0
      %p74 = por %p72, %p73
      %s75 = ssub.s32 %s20, %s46
      %s76 = ssub.s32 %s23, %s34
      %s77 = sor.u32 %s75, %s76
      %s78 = ssub.s32 %s22, %s38
      %s79 = sor.u32 %s77, %s78
      %p80 = scmp.eq.s32.totalorder %s79, 0
      %s82 = sadd.s32 %s81, 1
      %s83 = scalar_select %p80, %s81, %s82
      %p86 = pneg %p80
      %p87 = scmp.eq.s32.totalorder %s13, 2
      %p88 = por %p86, %p87
      %p89 = scmp.ne.s32.totalorder %s81, %s84
      %p90 = scmp.eq.s32.totalorder %s13, 0
      %p91 = por %p89, %p90
      %p92 = scmp.ne.s32.totalorder %s81, %s84
      %p93 = scmp.eq.s32.totalorder %s18, 2
      %p94 = por %p92, %p93
      %p95 = scmp.ne.s32.totalorder %s84, %s85
      %p96 = scmp.eq.s32.totalorder %s18, 0
      %p97 = por %p95, %p96
      %p98 = scmp.ne.s32.totalorder %s84, %s85
      %p99 = scmp.eq.s32.totalorder %s19, 2
      %p100 = por %p98, %p99
      %p102 = scmp.ne.s32.totalorder %s85, %s101
      %p103 = scmp.eq.s32.totalorder %s19, 0
      %p104 = por %p102, %p103
      %s105 = ssub.s32 %s20, %s46
      %s106 = ssub.s32 %s22, %s38
      %s107 = sor.u32 %s105, %s106
      %p108 = scmp.eq.s32.totalorder %s107, 0
      %s110 = sadd.s32 %s109, 1
      %s111 = scalar_select %p108, %s109, %s110
      %p114 = pneg %p108
      %p115 = scmp.eq.s32.totalorder %s13, 2
      %p116 = por %p114, %p115
      %p117 = scmp.ne.s32.totalorder %s109, %s112
      %p118 = scmp.eq.s32.totalorder %s13, 0
      %p119 = por %p117, %p118
      %p120 = scmp.ne.s32.totalorder %s109, %s112
      %p121 = scmp.eq.s32.totalorder %s18, 2
      %p122 = por %p120, %p121
      %p123 = scmp.ne.s32.totalorder %s112, %s113
      %p124 = scmp.eq.s32.totalorder %s18, 0
      %p125 = por %p123, %p124
      %p126 = scmp.ne.s32.totalorder %s112, %s113
      %p127 = scmp.eq.s32.totalorder %s19, 2
      %p128 = por %p126, %p127
      %p130 = scmp.ne.s32.totalorder %s113, %s129
      %p131 = scmp.eq.s32.totalorder %s19, 0
      %p132 = por %p130, %p131
      %s133 = ssub.s32 %s20, %s46
      %s134 = ssub.s32 %s21, %s42
      %s135 = sor.u32 %s133, %s134
      %s136 = ssub.s32 %s22, %s38
      %s137 = sor.u32 %s135, %s136
      %p138 = scmp.eq.s32.totalorder %s137, 0
      %s140 = sadd.s32 %s139, 1
      %s141 = scalar_select %p138, %s139, %s140
      %p144 = pneg %p138
      %p145 = scmp.eq.s32.totalorder %s13, 2
      %p146 = por %p144, %p145
      %p147 = scmp.ne.s32.totalorder %s139, %s142
      %p148 = scmp.eq.s32.totalorder %s13, 0
      %p149 = por %p147, %p148
      %p150 = scmp.ne.s32.totalorder %s139, %s142
      %p151 = scmp.eq.s32.totalorder %s18, 2
      %p152 = por %p150, %p151
      %p153 = scmp.ne.s32.totalorder %s142, %s143
      %p154 = scmp.eq.s32.totalorder %s18, 0
      %p155 = por %p153, %p154
      %p156 = scmp.ne.s32.totalorder %s142, %s143
      %p157 = scmp.eq.s32.totalorder %s19, 2
      %p158 = por %p156, %p157
      %p160 = scmp.ne.s32.totalorder %s143, %s159
      %p161 = scmp.eq.s32.totalorder %s19, 0
      %p162 = por %p160, %p161
      %p163 = scmp.le.s32.totalorder 1, %s13
      %p164 = scmp.lt.s32.totalorder %s13, 4
      %p165 = pnand %p163, %p164
      %p166 = pneg %p165
      // Predicated region
      $region9: #{encoder_forward.5} parent=5 // pred_check
        _
      $region10: #{encoder_forward.5} parent=5 // pred_check_branch
        %168 = sbr.rel (%p165) target = $region12
      $region11: #{encoder_forward.5} parent=5 // pred_region
        %s169 = ssub.s32 %s13, 1
        // Predicated region
        $region13: #{encoder_forward.5} parent=11 // pred_check
          %p170 = pneg %p67
        $region14: #{encoder_forward.5} parent=11 // pred_check_branch
          %172 = sbr.rel (%p170) target = $region16
        $region15: #{encoder_forward.5} parent=11 // pred_region
          %s173 = smul.u32 2, %s25
          %s175 = ssub.s32 256, 256
          %176 = vsyncadd [#allocation4], %s175
          %s177 = sadd.s32 %s27, %s173
          %s178 = smul.addr %s177, 128
          %s179 = scalar_lea.hbm %s0, %s178
          %s180 = sshll.u32 [#allocation3], 4
          %s181 = int_to_ptr.vmem [resolvable:$true] %s180
          %186 = dma.hbm_to_vmem [thread:$0]  %s179, 256, %s181, [#allocation4], 128, 128, 8
        $region16: #{encoder_forward.5} parent=11 // pred_fallthru
          _
      $region12: #{encoder_forward.5} parent=5 // pred_fallthru
        _
      %p187 = scmp.lt.s32.totalorder %s13, 3
      // Predicated region
      $region17: #{encoder_forward.5} parent=5 // pred_check
        %p188 = pneg %p187
      $region18: #{encoder_forward.5} parent=5 // pred_check_branch
        %190 = sbr.rel (%p188) target = $region20
      $region19: #{encoder_forward.5} parent=5 // pred_region
        // Predicated region
        $region21: #{encoder_forward.5} parent=19 // pred_check
          %p191 = pneg %p91
        $region22: #{encoder_forward.5} parent=19 // pred_check_branch
          %193 = sbr.rel (%p191) target = $region24
        $region23: #{encoder_forward.5} parent=19 // pred_region
          %s194 = sand.u32 %s81, 1
          %s195 = scalar_lea.sflag [#allocation6], %s194
          %s196 = sand.u32 %s81, 1
          %s197 = smul.addr %s196, 32
          %s198 = scalar_lea.vmem [#allocation5], %s197
          %s199 = smul.u32 4, %s23
          %s201 = ssub.s32 512, 512
          %202 = vsyncadd %s195, %s201
          %s203 = sadd.s32 %s22, %s199
          %s204 = smul.addr %s20, 4
          %s205 = sadd.s32 %s203, %s204
          %s206 = smul.addr %s205, 128
          %s207 = scalar_lea.hbm %s1, %s206
          %s208 = sshll.u32 %s198, 4
          %s209 = int_to_ptr.vmem [resolvable:$true] %s208
          %214 = dma.hbm_to_vmem [thread:$0]  %s207, 512, %s209, %s195, 128, 128, 8
        $region24: #{encoder_forward.5} parent=19 // pred_fallthru
          _
        // Predicated region
        $region25: #{encoder_forward.5} parent=19 // pred_check
          %p215 = pneg %p119
        $region26: #{encoder_forward.5} parent=19 // pred_check_branch
          %217 = sbr.rel (%p215) target = $region28
        $region27: #{encoder_forward.5} parent=19 // pred_region
          %p218 = scmp.lt.s32.totalorder %s20, 2
          %s219 = scalar_select %p218, %s20, 2
          %p220 = scmp.lt.s32.totalorder %s22, 0
          %s221 = scalar_select %p220, %s22, 0
          %s222 = sadd.s32 %s221, %s219
          %s223 = scalar_lea.vmem %s2, %s222
        $region28: #{encoder_forward.5} parent=19 // pred_fallthru
          _
      $region20: #{encoder_forward.5} parent=5 // pred_fallthru
        _
      %p224 = scmp.le.s32.totalorder 1, %s13
      %p225 = scmp.lt.s32.totalorder %s13, 4
      %p226 = pnand %p224, %p225
      %p227 = pneg %p226
      // Predicated region
      $region29: #{encoder_forward.5} parent=5 // pred_check
        _
      $region30: #{encoder_forward.5} parent=5 // pred_check_branch
        %229 = sbr.rel (%p226) target = $region32
      $region31: #{encoder_forward.5} parent=5 // pred_region
        %s230 = ssub.s32 %s13, 1
        // Predicated region
        $region33: #{encoder_forward.5} parent=31 // pred_check
          %p231 = pneg %p67
        $region34: #{encoder_forward.5} parent=31 // pred_check_branch
          %233 = sbr.rel (%p231) target = $region36
        $region35: #{encoder_forward.5} parent=31 // pred_region
          %234 = dma.done [#allocation4], 256
        $region36: #{encoder_forward.5} parent=31 // pred_fallthru
          _
        %s235 = sand.u32 %s84, 1
        %s236 = scalar_lea.sflag [#allocation6], %s235
        %s237 = sand.u32 %s84, 1
        %s238 = smul.addr %s237, 32
        %s239 = scalar_lea.vmem [#allocation5], %s238
        // Predicated region
        $region37: #{encoder_forward.5} parent=31 // pred_check
          %p240 = pneg %p97
        $region38: #{encoder_forward.5} parent=31 // pred_check_branch
          %242 = sbr.rel (%p240) target = $region40
        $region39: #{encoder_forward.5} parent=31 // pred_region
          %243 = dma.done %s236, 512
        $region40: #{encoder_forward.5} parent=31 // pred_fallthru
          _
        %p244 = pneg %p67
        %p245 = pneg %p64
        %s246 = sand.u32 %s84, 1
        %s247 = scalar_lea.sflag [#allocation6], %s246
        %s248 = sand.u32 %s84, 1
        %s249 = smul.addr %s248, 32
        %s250 = scalar_lea.vmem [#allocation5], %s249
        %p251 = pneg %p97
        %p252 = pneg %p94
        %p253 = scmp.lt.s32.totalorder %s24, 2
        %s254 = scalar_select %p253, %s24, 2
        %p255 = scmp.lt.s32.totalorder %s26, 0
        %s256 = scalar_select %p255, %s26, 0
        %s257 = sadd.s32 %s256, %s254
        %s258 = scalar_lea.vmem %s2, %s257
        %p259 = pneg %p125
        %p260 = pneg %p122
        %p261 = pneg %p155
        %p262 = pneg %p152
        %s263 = smul.u32 2, %s25
        %p264 = scmp.lt.s32.totalorder %s24, 2
        %s265 = scalar_select %p264, %s24, 2
        %p266 = scmp.lt.s32.totalorder %s263, 1
        %s267 = scalar_select %p266, %s263, 1
        %p268 = scmp.lt.s32.totalorder %s26, 0
        %s269 = scalar_select %p268, %s26, 0
        %s270 = sadd.s32 %s269, %s267
        %s271 = smul.addr %s265, 2
        %s272 = sadd.s32 %s270, %s271
        %s273 = smul.addr %s272, 8
        %s274 = scalar_lea.vmem %s3, %s273
        %s275 = smul.u32 2, %s25
        %s276 = smul.u32 4, %s27
        %p277 = scmp.lt.s32.totalorder %s24, 2
        %s278 = scalar_select %p277, %s24, 2
        %p279 = scmp.lt.s32.totalorder %s26, 0
        %s280 = scalar_select %p279, %s26, 0
        %s281 = sadd.s32 %s280, %s278
        %s282 = scalar_lea.vmem %s2, %s281
        %s283 = smul.u32 2, %s25
        %p284 = scmp.lt.s32.totalorder %s24, 2
        %s285 = scalar_select %p284, %s24, 2
        %p286 = scmp.lt.s32.totalorder %s283, 1
        %s287 = scalar_select %p286, %s283, 1
        %p288 = scmp.lt.s32.totalorder %s26, 0
        %s289 = scalar_select %p288, %s26, 0
        %s290 = sadd.s32 %s289, %s287
        %s291 = smul.addr %s285, 2
        %s292 = sadd.s32 %s290, %s291
        %s293 = smul.addr %s292, 8
        %s294 = scalar_lea.vmem %s3, %s293
        %s295 = smul.u32 2, %s25
        %p296 = scmp.eq.s32.totalorder %s27, 0
        // Predicated region
        $region41: #{encoder_forward.5} parent=31 // pred_check
          %p297 = pneg %p296
        $region42: #{encoder_forward.5} parent=31 // pred_check_branch
          %299 = sbr.rel (%p297) target = $region44
        $region43: #{encoder_forward.5} parent=31 // pred_region
          %vm300 = vcmask 261120
          %301 = vst.msk [vmem:[#allocation2] sm:$0xff] %vm300, 0.0
          %302 = vst.msk [vmem:[#allocation2 + $0x8] sm:$0xff] %vm300, 0.0
        $region44: #{encoder_forward.5} parent=31 // pred_fallthru
          _
        %v303 = vld [vmem:[#allocation2] sm:$0xff]
        %v304 = vld [vmem:[#allocation2 + $0x8] sm:$0xff]
        %v305 = vld [vmem:[#allocation3] sm:$0xff]
        %v306 = vld [vmem:[#allocation3 + $0x8] sm:$0xff]
        %v307 = vld [vmem:[%s239] sm:$0xff]
        %v308 = vld [vmem:[%s239 + $0x8] sm:$0xff]
        %v309 = vld [vmem:[%s239 + $0x10] sm:$0xff]
        %v310 = vld [vmem:[%s239 + $0x18] sm:$0xff]
        %vm311 = vcmask 261120
        %v313 = vsel %vm311, %v305, 0
        %v316 = vsel %vm311, %v306, 0
        %318 = vmatprep.subr.mxu0 0.0
        %319 = vmatpush1.msra.mxu0 %v307
        %320 = vmatprep.subr.mxu0 0.0
        %321 = vmatpush1.msra.mxu0 %v308
        %322 = vmatprep.subr.mxu0 0.0
        %323 = vmatpush1.msra.mxu0 %v309
        %324 = vmatprep.subr.mxu0 0.0
        %325 = vmatpush1.msra.mxu0 %v310
        %326 = vmatprep.subr.mxu0 0.0
        %327 = vmatpush1.msra.mxu0 0.0
        %328 = vmatprep.subr.mxu0 0.0
        %329 = vmatpush1.msra.mxu0 0.0
        %330 = vmatprep.subr.mxu0 0.0
        %331 = vmatpush1.msra.mxu0 0.0
        %332 = vmatprep.subr.mxu0 0.0
        %333 = vmatpush1.msra.mxu0 0.0
        %334 = vmatprep.subr.mxu0 0.0
        %335 = vmatpush1.msra.mxu0 0.0
        %336 = vmatprep.subr.mxu0 0.0
        %337 = vmatpush1.msra.mxu0 0.0
        %338 = vmatprep.subr.mxu0 0.0
        %339 = vmatpush1.msra.mxu0 0.0
        %340 = vmatprep.subr.mxu0 0.0
        %341 = vmatpush1.msra.mxu0 0.0
        %342 = vmatprep.subr.mxu0 0.0
        %343 = vmatpush1.msra.mxu0 0.0
        %344 = vmatprep.subr.mxu0 0.0
        %345 = vmatpush1.msra.mxu0 0.0
        %346 = vmatprep.subr.mxu0 0.0
        %347 = vmatpush1.msra.mxu0 0.0
        %348 = vmatprep.subr.mxu0 0.0
        %349 = vmatpush1.msra.mxu0 0.0
        %350 = vmatprep.subr.mxu0 0.0
        %351 = vmatpush1.msra.mxu0 0.0
        %352 = vmatprep.subr.mxu0 0.0
        %353 = vmatpush1.msra.mxu0 0.0
        %354 = vmatprep.subr.mxu0 0.0
        %355 = vmatpush1.msra.mxu0 0.0
        %356 = vmatprep.subr.mxu0 0.0
        %357 = vmatpush1.msra.mxu0 0.0
        %358 = vmatprep.subr.mxu0 0.0
        %359 = vmatpush1.msra.mxu0 0.0
        %360 = vmatprep.subr.mxu0 0.0
        %361 = vmatpush1.msra.mxu0 0.0
        %362 = vmatprep.subr.mxu0 0.0
        %363 = vmatpush1.msra.mxu0 0.0
        %364 = vmatprep.subr.mxu0 0.0
        %365 = vmatpush1.msra.mxu0 0.0
        %366 = vmatprep.subr.mxu0 0.0
        %367 = vmatpush1.msra.mxu0 0.0
        %368 = vmatprep.subr.mxu0 0.0
        %369 = vmatpush1.msra.mxu0 0.0
        %370 = vmatprep.subr.mxu0 0.0
        %371 = vmatpush1.msra.mxu0 0.0
        %372 = vmatprep.subr.mxu0 0.0
        %373 = vmatpush1.msra.mxu0 0.0
        %374 = vmatprep.subr.mxu0 0.0
        %375 = vmatpush1.msra.mxu0 0.0
        %376 = vmatprep.subr.mxu0 0.0
        %377 = vmatpush1.msra.mxu0 0.0
        %378 = vmatprep.subr.mxu0 0.0
        %379 = vmatpush1.msra.mxu0 0.0
        %380 = vmatprep.subr.mxu0 0.0
        %381 = vmatpush1.msra.mxu0 0.0
        %382 = vmatprep.mubr.f32.mxu0 0.0
        %383 = vmatmul.mubr.f32.gmra.mrb[0].mxu0 %v313
        %v384 = vpop.f32.mrb[0].mxu0
        %v385 = vadd.f32 0.0, %v384
        %v386 = vpop.f32.mrb[0].mxu0
        %387 = vmatprep.mubr.f32.mxu0 0.0
        %388 = vmatmul.mubr.f32.gmra.mrb[0].mxu0 %v316
        %v389 = vpop.f32.mrb[0].mxu0
        %v390 = vadd.f32 0.0, %v389
        %v391 = vpop.f32.mrb[0].mxu0
        %392 = vdwg.mxu0
        %v393 = vadd.f32 %v303, %v385
        %v394 = vadd.f32 %v304, %v390
        %395 = vst.msk [vmem:[#allocation2] sm:$0xff] %vm311, %v393
        %396 = vst.msk [vmem:[#allocation2 + $0x8] sm:$0xff] %vm311, %v394
        // Predicated region
        $region45: #{encoder_forward.5} parent=31 // pred_check
          %p397 = pneg %p296
        $region46: #{encoder_forward.5} parent=31 // pred_check_branch
          %399 = sbr.rel (%p397) target = $region48
        $region47: #{encoder_forward.5} parent=31 // pred_region
          %v400 = vld [vmem:[#allocation2] sm:$0xff]
          %v401 = vld [vmem:[#allocation2 + $0x8] sm:$0xff]
          %v402 = vld [vmem:[%s282] sm:$0x1]
          %v404 = vlaneseq
          %v405 = vshrl.u32 %v404, 7
          %v406 = vsub.s32 0, %v405
          %v407 = vrot.slane %v402, %v406
          %v409 = vadd.f32 %v400, %v407
          %v410 = vadd.f32 %v401, %v407
          %411 = vst.msk [vmem:[%s294] sm:$0xff] %vm311, %v409
          %412 = vst.msk [vmem:[%s294 + $0x8] sm:$0xff] %vm311, %v410
        $region48: #{encoder_forward.5} parent=31 // pred_fallthru
          _
        %s413 = smul.u32 2, %s25
        %p414 = scmp.lt.s32.totalorder %s24, 2
        %s415 = scalar_select %p414, %s24, 2
        %p416 = scmp.lt.s32.totalorder %s413, 1
        %s417 = scalar_select %p416, %s413, 1
        %p418 = scmp.lt.s32.totalorder %s26, 0
        %s419 = scalar_select %p418, %s26, 0
        %s420 = sadd.s32 %s419, %s417
        %s421 = smul.addr %s415, 2
        %s422 = sadd.s32 %s420, %s421
        %s423 = smul.addr %s422, 8
        %s424 = scalar_lea.vmem %s3, %s423
        // Predicated region
        $region49: #{encoder_forward.5} parent=31 // pred_check
          %p425 = pneg %p152
        $region50: #{encoder_forward.5} parent=31 // pred_check_branch
          %427 = sbr.rel (%p425) target = $region52
        $region51: #{encoder_forward.5} parent=31 // pred_region
          %s428 = smul.u32 2, %s25
        $region52: #{encoder_forward.5} parent=31 // pred_fallthru
          _
      $region32: #{encoder_forward.5} parent=5 // pred_fallthru
        _
      %p429 = scmp.le.s32.totalorder 2, %s13
      // Predicated region
      $region53: #{encoder_forward.5} parent=5 // pred_check
        %p430 = pneg %p429
      $region54: #{encoder_forward.5} parent=5 // pred_check_branch
        %432 = sbr.rel (%p430) target = $region56
      $region55: #{encoder_forward.5} parent=5 // pred_region
        %s433 = ssub.s32 %s13, 2
        // Predicated region
        $region57: #{encoder_forward.5} parent=55 // pred_check
          %p434 = pneg %p158
        $region58: #{encoder_forward.5} parent=55 // pred_check_branch
          %436 = sbr.rel (%p434) target = $region60
        $region59: #{encoder_forward.5} parent=55 // pred_region
          %s437 = smul.u32 2, %s29
          %p438 = scmp.lt.s32.totalorder %s28, 2
          %s439 = scalar_select %p438, %s28, 2
          %p440 = scmp.lt.s32.totalorder %s437, 1
          %s441 = scalar_select %p440, %s437, 1
          %p442 = scmp.lt.s32.totalorder %s30, 0
          %s443 = scalar_select %p442, %s30, 0
          %s444 = sadd.s32 %s443, %s441
          %s445 = smul.addr %s439, 2
          %s446 = sadd.s32 %s444, %s445
          %s447 = smul.addr %s446, 8
          %s448 = scalar_lea.vmem %s3, %s447
        $region60: #{encoder_forward.5} parent=55 // pred_fallthru
          _
      $region56: #{encoder_forward.5} parent=5 // pred_fallthru
        _
    $region6: #{encoder_forward.5} parent=1 // loop_footer
      %s17 = sadd.s32 1, %s13
    $region7: #{encoder_forward.5} parent=1 // loop_footer_branch
      %12 = sbr.rel target = $region3
    $region8: #{encoder_forward.5} parent=1 // loop_exit
      _
    %449 = vsyncpa [#allocation4], 1
    %s450 = scalar_lea.sflag [#allocation4], 1
    %451 = vsyncpa %s450, 1
    %452 = vsyncpa [#allocation6], 1
    %s453 = scalar_lea.sflag [#allocation6], 1
    %454 = vsyncpa %s453, 1

// kernel: encoder_forward.6
$region0: #{encoder_forward.6}
  #allocation0 [shape = 'u32[]', space=smem, size = 0x4, offset = 0x4, fixed_abs, tag = 'smem constant byte address 0x4 - core index']
  #allocation1 [shape = 'u32[144,128]{1,0:T(1,128)}', space=vmem, size = 0x12000, scoped, tag = 'internal scratch']
  %s0 = inlined_call_operand.vmem [shape: f32[8,8,8], index: 0, kind: input, shape index: {}]
  %s1 = inlined_call_operand.vmem [shape: f32[8,8,8], index: 1, kind: input, shape index: {}]
  %s2 = inlined_call_operand.vmem [shape: f32[8,8,8], index: 2, kind: input, shape index: {}]
  %s3 = inlined_call_operand.vmem [shape: f32[8,8,8], index: 3, kind: output, shape index: {}]
  %s4 = sld [smem:[#allocation0]]
  $region45: #{encoder_forward.6} parent=0
    _
  %s6 = ssub.s32 1, %s4
  %s7 = scalar_select 0, %s6, %s4
  loop: start=0, step=1, limit=10
  $region2: #{encoder_forward.6} parent=0 // loop_pre_header
    _
  $region3: #{encoder_forward.6} parent=0 // loop_header
    %s9 = sphi 0, %s13
    %p10 = scmp.ge.s32.totalorder %s9, 10
    %s19 = sphi 0, %s21
    %s22 = sphi 0, %s19
    %s23 = sphi 0, %s22
    %s39 = sphi 0, %s23
    %s45 = sphi 0, %s47
    %s48 = sphi 0, %s45
    %s49 = sphi 0, %s48
    %s65 = sphi 0, %s49
    %s71 = sphi 0, %s73
    %s74 = sphi 0, %s71
    %s75 = sphi 0, %s74
    %s91 = sphi 0, %s75
    %s97 = sphi 0, %s99
    %s100 = sphi 0, %s97
    %s101 = sphi 0, %s100
    %s117 = sphi 0, %s101
  $region4: #{encoder_forward.6} parent=0 // loop_header_branch
    %12 = sbr.rel (%p10) target = $region8
  $region5: #{encoder_forward.6} parent=0 // loop_body
    %s14 = ssub.s32 %s9, 1
    %s15 = ssub.s32 %s9, 2
    %s16 = sadd.s32 %s9, 1
    %s17 = ssub.s32 %s9, %s16
    %p18 = scmp.eq.s32.totalorder %s17, 0
    %s20 = sadd.s32 %s19, 1
    %s21 = scalar_select %p18, %s19, %s20
    %p24 = pneg %p18
    %p25 = scmp.eq.s32.totalorder %s9, 7
    %p26 = por %p24, %p25
    %p27 = scmp.ne.s32.totalorder %s19, %s22
    %p28 = scmp.eq.s32.totalorder %s9, 0
    %p29 = por %p27, %p28
    %p30 = scmp.ne.s32.totalorder %s19, %s22
    %p31 = scmp.eq.s32.totalorder %s14, 7
    %p32 = por %p30, %p31
    %p33 = scmp.ne.s32.totalorder %s22, %s23
    %p34 = scmp.eq.s32.totalorder %s14, 0
    %p35 = por %p33, %p34
    %p36 = scmp.ne.s32.totalorder %s22, %s23
    %p37 = scmp.eq.s32.totalorder %s15, 7
    %p38 = por %p36, %p37
    %p40 = scmp.ne.s32.totalorder %s23, %s39
    %p41 = scmp.eq.s32.totalorder %s15, 0
    %p42 = por %p40, %p41
    %s43 = ssub.s32 %s9, %s16
    %p44 = scmp.eq.s32.totalorder %s43, 0
    %s46 = sadd.s32 %s45, 1
    %s47 = scalar_select %p44, %s45, %s46
    %p50 = pneg %p44
    %p51 = scmp.eq.s32.totalorder %s9, 7
    %p52 = por %p50, %p51
    %p53 = scmp.ne.s32.totalorder %s45, %s48
    %p54 = scmp.eq.s32.totalorder %s9, 0
    %p55 = por %p53, %p54
    %p56 = scmp.ne.s32.totalorder %s45, %s48
    %p57 = scmp.eq.s32.totalorder %s14, 7
    %p58 = por %p56, %p57
    %p59 = scmp.ne.s32.totalorder %s48, %s49
    %p60 = scmp.eq.s32.totalorder %s14, 0
    %p61 = por %p59, %p60
    %p62 = scmp.ne.s32.totalorder %s48, %s49
    %p63 = scmp.eq.s32.totalorder %s15, 7
    %p64 = por %p62, %p63
    %p66 = scmp.ne.s32.totalorder %s49, %s65
    %p67 = scmp.eq.s32.totalorder %s15, 0
    %p68 = por %p66, %p67
    %s69 = ssub.s32 %s9, %s16
    %p70 = scmp.eq.s32.totalorder %s69, 0
    %s72 = sadd.s32 %s71, 1
    %s73 = scalar_select %p70, %s71, %s72
    %p76 = pneg %p70
    %p77 = scmp.eq.s32.totalorder %s9, 7
    %p78 = por %p76, %p77
    %p79 = scmp.ne.s32.totalorder %s71, %s74
    %p80 = scmp.eq.s32.totalorder %s9, 0
    %p81 = por %p79, %p80
    %p82 = scmp.ne.s32.totalorder %s71, %s74
    %p83 = scmp.eq.s32.totalorder %s14, 7
    %p84 = por %p82, %p83
    %p85 = scmp.ne.s32.totalorder %s74, %s75
    %p86 = scmp.eq.s32.totalorder %s14, 0
    %p87 = por %p85, %p86
    %p88 = scmp.ne.s32.totalorder %s74, %s75
    %p89 = scmp.eq.s32.totalorder %s15, 7
    %p90 = por %p88, %p89
    %p92 = scmp.ne.s32.totalorder %s75, %s91
    %p93 = scmp.eq.s32.totalorder %s15, 0
    %p94 = por %p92, %p93
    %s95 = ssub.s32 %s9, %s16
    %p96 = scmp.eq.s32.totalorder %s95, 0
    %s98 = sadd.s32 %s97, 1
    %s99 = scalar_select %p96, %s97, %s98
    %p102 = pneg %p96
    %p103 = scmp.eq.s32.totalorder %s9, 7
    %p104 = por %p102, %p103
    %p105 = scmp.ne.s32.totalorder %s97, %s100
    %p106 = scmp.eq.s32.totalorder %s9, 0
    %p107 = por %p105, %p106
    %p108 = scmp.ne.s32.totalorder %s97, %s100
    %p109 = scmp.eq.s32.totalorder %s14, 7
    %p110 = por %p108, %p109
    %p111 = scmp.ne.s32.totalorder %s100, %s101
    %p112 = scmp.eq.s32.totalorder %s14, 0
    %p113 = por %p111, %p112
    %p114 = scmp.ne.s32.totalorder %s100, %s101
    %p115 = scmp.eq.s32.totalorder %s15, 7
    %p116 = por %p114, %p115
    %p118 = scmp.ne.s32.totalorder %s101, %s117
    %p119 = scmp.eq.s32.totalorder %s15, 0
    %p120 = por %p118, %p119
    %p121 = scmp.le.s32.totalorder 1, %s9
    %p122 = scmp.lt.s32.totalorder %s9, 9
    %p123 = pnand %p121, %p122
    %p124 = pneg %p123
    // Predicated region
    $region9: #{encoder_forward.6} parent=5 // pred_check
      _
    $region10: #{encoder_forward.6} parent=5 // pred_check_branch
      %126 = sbr.rel (%p123) target = $region12
    $region11: #{encoder_forward.6} parent=5 // pred_region
      %s127 = ssub.s32 %s9, 1
    $region12: #{encoder_forward.6} parent=5 // pred_fallthru
      _
    %p128 = scmp.lt.s32.totalorder %s9, 8
    // Predicated region
    $region13: #{encoder_forward.6} parent=5 // pred_check
      %p129 = pneg %p128
    $region14: #{encoder_forward.6} parent=5 // pred_check_branch
      %131 = sbr.rel (%p129) target = $region16
    $region15: #{encoder_forward.6} parent=5 // pred_region
      // Predicated region
      $region17: #{encoder_forward.6} parent=15 // pred_check
        %p132 = pneg %p29
      $region18: #{encoder_forward.6} parent=15 // pred_check_branch
        %134 = sbr.rel (%p132) target = $region20
      $region19: #{encoder_forward.6} parent=15 // pred_region
        %p135 = scmp.lt.s32.totalorder %s9, 7
        %s136 = scalar_select %p135, %s9, 7
        %s137 = smul.addr %s136, 8
        %s138 = scalar_lea.vmem %s0, %s137
      $region20: #{encoder_forward.6} parent=15 // pred_fallthru
        _
      // Predicated region
      $region21: #{encoder_forward.6} parent=15 // pred_check
        %p139 = pneg %p55
      $region22: #{encoder_forward.6} parent=15 // pred_check_branch
        %141 = sbr.rel (%p139) target = $region24
      $region23: #{encoder_forward.6} parent=15 // pred_region
        %p142 = scmp.lt.s32.totalorder %s9, 7
        %s143 = scalar_select %p142, %s9, 7
        %s144 = smul.addr %s143, 8
        %s145 = scalar_lea.vmem %s1, %s144
      $region24: #{encoder_forward.6} parent=15 // pred_fallthru
        _
      // Predicated region
      $region25: #{encoder_forward.6} parent=15 // pred_check
        %p146 = pneg %p81
      $region26: #{encoder_forward.6} parent=15 // pred_check_branch
        %148 = sbr.rel (%p146) target = $region28
      $region27: #{encoder_forward.6} parent=15 // pred_region
        %p149 = scmp.lt.s32.totalorder %s9, 7
        %s150 = scalar_select %p149, %s9, 7
        %s151 = smul.addr %s150, 8
        %s152 = scalar_lea.vmem %s2, %s151
      $region28: #{encoder_forward.6} parent=15 // pred_fallthru
        _
    $region16: #{encoder_forward.6} parent=5 // pred_fallthru
      _
    %p153 = scmp.le.s32.totalorder 1, %s9
    %p154 = scmp.lt.s32.totalorder %s9, 9
    %p155 = pnand %p153, %p154
    %p156 = pneg %p155
    // Predicated region
    $region29: #{encoder_forward.6} parent=5 // pred_check
      _
    $region30: #{encoder_forward.6} parent=5 // pred_check_branch
      %158 = sbr.rel (%p155) target = $region32
    $region31: #{encoder_forward.6} parent=5 // pred_region
      %s159 = ssub.s32 %s9, 1
      %p160 = scmp.lt.s32.totalorder %s14, 7
      %s161 = scalar_select %p160, %s14, 7
      %s162 = smul.addr %s161, 8
      %s163 = scalar_lea.vmem %s0, %s162
      %p164 = pneg %p35
      %p165 = pneg %p32
      %p166 = scmp.lt.s32.totalorder %s14, 7
      %s167 = scalar_select %p166, %s14, 7
      %s168 = smul.addr %s167, 8
      %s169 = scalar_lea.vmem %s1, %s168
      %p170 = pneg %p61
      %p171 = pneg %p58
      %p172 = scmp.lt.s32.totalorder %s14, 7
      %s173 = scalar_select %p172, %s14, 7
      %s174 = smul.addr %s173, 8
      %s175 = scalar_lea.vmem %s2, %s174
      %p176 = pneg %p87
      %p177 = pneg %p84
      %p178 = pneg %p113
      %p179 = pneg %p110
      %p180 = scmp.lt.s32.totalorder %s14, 7
      %s181 = scalar_select %p180, %s14, 7
      %s182 = smul.addr %s181, 8
      %s183 = scalar_lea.vmem %s3, %s182
      %p184 = scmp.lt.s32.totalorder %s14, 7
      %s185 = scalar_select %p184, %s14, 7
      %s186 = smul.addr %s185, 8
      %s187 = scalar_lea.vmem %s0, %s186
      %p188 = scmp.lt.s32.totalorder %s14, 7
      %s189 = scalar_select %p188, %s14, 7
      %s190 = smul.addr %s189, 8
      %s191 = scalar_lea.vmem %s1, %s190
      %p192 = scmp.lt.s32.totalorder %s14, 7
      %s193 = scalar_select %p192, %s14, 7
      %s194 = smul.addr %s193, 8
      %s195 = scalar_lea.vmem %s2, %s194
      %p196 = scmp.lt.s32.totalorder %s14, 7
      %s197 = scalar_select %p196, %s14, 7
      %s198 = smul.addr %s197, 8
      %s199 = scalar_lea.vmem %s3, %s198
      %v200 = vld [vmem:[%s187] sm:$0xff]
      %v201 = vld [vmem:[%s191] sm:$0xff]
      %v202 = vld [vmem:[%s195] sm:$0xff]
      %vm203 = vcmask 64512
      %v205 = vsel %vm203, %v200, 0
      %v208 = vsel %vm203, %v201, 0
      %210 = vmatprep.subr.mxu0 0.0
      %211 = vmatpush1.xpose.msra.mxu0 %v208
      %212 = vmatprep.subr.mxu0 0.0
      %213 = vmatpush1.xpose.msra.mxu0 0.0
      %214 = vmatprep.subr.mxu0 0.0
      %215 = vmatpush1.xpose.msra.mxu0 0.0
      %216 = vmatprep.subr.mxu0 0.0
      %217 = vmatpush1.xpose.msra.mxu0 0.0
      %218 = vmatprep.subr.mxu0 0.0
      %219 = vmatpush1.xpose.msra.mxu0 0.0
      %220 = vmatprep.subr.mxu0 0.0
      %221 = vmatpush1.xpose.msra.mxu0 0.0
      %222 = vmatprep.subr.mxu0 0.0
      %223 = vmatpush1.xpose.msra.mxu0 0.0
      %224 = vmatprep.subr.mxu0 0.0
      %225 = vmatpush1.xpose.msra.mxu0 0.0
      %226 = vmatprep.subr.mxu0 0.0
      %227 = vmatpush1.xpose.msra.mxu0 0.0
      %228 = vmatprep.subr.mxu0 0.0
      %229 = vmatpush1.xpose.msra.mxu0 0.0
      %230 = vmatprep.subr.mxu0 0.0
      %231 = vmatpush1.xpose.msra.mxu0 0.0
      %232 = vmatprep.subr.mxu0 0.0
      %233 = vmatpush1.xpose.msra.mxu0 0.0
      %234 = vmatprep.subr.mxu0 0.0
      %235 = vmatpush1.xpose.msra.mxu0 0.0
      %236 = vmatprep.subr.mxu0 0.0
      %237 = vmatpush1.xpose.msra.mxu0 0.0
      %238 = vmatprep.subr.mxu0 0.0
      %239 = vmatpush1.xpose.msra.mxu0 0.0
      %240 = vmatprep.subr.mxu0 0.0
      %241 = vmatpush1.xpose.msra.mxu0 0.0
      %242 = vmatprep.subr.mxu0 0.0
      %243 = vmatpush1.xpose.msra.mxu0 0.0
      %244 = vmatprep.subr.mxu0 0.0
      %245 = vmatpush1.xpose.msra.mxu0 0.0
      %246 = vmatprep.subr.mxu0 0.0
      %247 = vmatpush1.xpose.msra.mxu0 0.0
      %248 = vmatprep.subr.mxu0 0.0
      %249 = vmatpush1.xpose.msra.mxu0 0.0
      %250 = vmatprep.subr.mxu0 0.0
      %251 = vmatpush1.xpose.msra.mxu0 0.0
      %252 = vmatprep.subr.mxu0 0.0
      %253 = vmatpush1.xpose.msra.mxu0 0.0
      %254 = vmatprep.subr.mxu0 0.0
      %255 = vmatpush1.xpose.msra.mxu0 0.0
      %256 = vmatprep.subr.mxu0 0.0
      %257 = vmatpush1.xpose.msra.mxu0 0.0
      %258 = vmatprep.subr.mxu0 0.0
      %259 = vmatpush1.xpose.msra.mxu0 0.0
      %260 = vmatprep.subr.mxu0 0.0
      %261 = vmatpush1.xpose.msra.mxu0 0.0
      %262 = vmatprep.subr.mxu0 0.0
      %263 = vmatpush1.xpose.msra.mxu0 0.0
      %264 = vmatprep.subr.mxu0 0.0
      %265 = vmatpush1.xpose.msra.mxu0 0.0
      %266 = vmatprep.subr.mxu0 0.0
      %267 = vmatpush1.xpose.msra.mxu0 0.0
      %268 = vmatprep.subr.mxu0 0.0
      %269 = vmatpush1.xpose.msra.mxu0 0.0
      %270 = vmatprep.subr.mxu0 0.0
      %271 = vmatpush1.xpose.msra.mxu0 0.0
      %272 = vmatprep.subr.mxu0 0.0
      %273 = vmatpush1.xpose.msra.mxu0 0.0
      %274 = vmatprep.mubr.f32.mxu0 0.0
      %275 = vmatmul.mubr.f32.gmra.mrb[0].mxu0 %v205
      %v276 = vpop.f32.mrb[0].mxu0
      %v277 = vadd.f32 0.0, %v276
      %v278 = vpop.f32.mrb[0].mxu0
      %279 = vdwg.mxu0
      %v280 = vsel %vm203, %v277, -inf
      %281 = vmax.xlane.f32.xlu0 %v280
      %v282 = vpop.xlane.xlu0 %281
      %v283 = vsub.f32 %v277, %v282
      %v284 = vmul.f32 %v283, 1.442695
      %v285 = vpow.pop %v284
      %v286 = vsel %vm203, %v285, 0.0
      %287 = vadd.xlane.f32.xlu0 %v286
      %v288 = vpop.xlane.xlu0 %287
      %v289 = vrcp.pop %v288
      %v290 = vmul.f32 %v288, %v289
      %v291 = vsub.f32 2.0, %v290
      %v292 = vmul.f32 %v289, %v291
      %v293 = vmul.f32 %v285, %v292
      %v295 = vsel %vm203, %v293, 0
      %297 = vmatprep.subr.mxu0 0.0
      %298 = vmatpush1.msra.mxu0 %v202
      %299 = vmatprep.subr.mxu0 0.0
      %300 = vmatpush1.msra.mxu0 0.0
      %301 = vmatprep.subr.mxu0 0.0
      %302 = vmatpush1.msra.mxu0 0.0
      %303 = vmatprep.subr.mxu0 0.0
      %304 = vmatpush1.msra.mxu0 0.0
      %305 = vmatprep.subr.mxu0 0.0
      %306 = vmatpush1.msra.mxu0 0.0
      %307 = vmatprep.subr.mxu0 0.0
      %308 = vmatpush1.msra.mxu0 0.0
      %309 = vmatprep.subr.mxu0 0.0
      %310 = vmatpush1.msra.mxu0 0.0
      %311 = vmatprep.subr.mxu0 0.0
      %312 = vmatpush1.msra.mxu0 0.0
      %313 = vmatprep.subr.mxu0 0.0
      %314 = vmatpush1.msra.mxu0 0.0
      %315 = vmatprep.subr.mxu0 0.0
      %316 = vmatpush1.msra.mxu0 0.0
      %317 = vmatprep.subr.mxu0 0.0
      %318 = vmatpush1.msra.mxu0 0.0
      %319 = vmatprep.subr.mxu0 0.0
      %320 = vmatpush1.msra.mxu0 0.0
      %321 = vmatprep.subr.mxu0 0.0
      %322 = vmatpush1.msra.mxu0 0.0
      %323 = vmatprep.subr.mxu0 0.0
      %324 = vmatpush1.msra.mxu0 0.0
      %325 = vmatprep.subr.mxu0 0.0
      %326 = vmatpush1.msra.mxu0 0.0
      %327 = vmatprep.subr.mxu0 0.0
      %328 = vmatpush1.msra.mxu0 0.0
      %329 = vmatprep.subr.mxu0 0.0
      %330 = vmatpush1.msra.mxu0 0.0
      %331 = vmatprep.subr.mxu0 0.0
      %332 = vmatpush1.msra.mxu0 0.0
      %333 = vmatprep.subr.mxu0 0.0
      %334 = vmatpush1.msra.mxu0 0.0
      %335 = vmatprep.subr.mxu0 0.0
      %336 = vmatpush1.msra.mxu0 0.0
      %337 = vmatprep.subr.mxu0 0.0
      %338 = vmatpush1.msra.mxu0 0.0
      %339 = vmatprep.subr.mxu0 0.0
      %340 = vmatpush1.msra.mxu0 0.0
      %341 = vmatprep.subr.mxu0 0.0
      %342 = vmatpush1.msra.mxu0 0.0
      %343 = vmatprep.subr.mxu0 0.0
      %344 = vmatpush1.msra.mxu0 0.0
      %345 = vmatprep.subr.mxu0 0.0
      %346 = vmatpush1.msra.mxu0 0.0
      %347 = vmatprep.subr.mxu0 0.0
      %348 = vmatpush1.msra.mxu0 0.0
      %349 = vmatprep.subr.mxu0 0.0
      %350 = vmatpush1.msra.mxu0 0.0
      %351 = vmatprep.subr.mxu0 0.0
      %352 = vmatpush1.msra.mxu0 0.0
      %353 = vmatprep.subr.mxu0 0.0
      %354 = vmatpush1.msra.mxu0 0.0
      %355 = vmatprep.subr.mxu0 0.0
      %356 = vmatpush1.msra.mxu0 0.0
      %357 = vmatprep.subr.mxu0 0.0
      %358 = vmatpush1.msra.mxu0 0.0
      %359 = vmatprep.subr.mxu0 0.0
      %360 = vmatpush1.msra.mxu0 0.0
      %361 = vmatprep.mubr.f32.mxu0 0.0
      %362 = vmatmul.mubr.f32.gmra.mrb[0].mxu0 %v295
      %v363 = vpop.f32.mrb[0].mxu0
      %v364 = vadd.f32 0.0, %v363
      %v365 = vpop.f32.mrb[0].mxu0
      %366 = vdwg.mxu0
      %367 = vst.msk [vmem:[%s199] sm:$0xff] %vm203, %v364
      %p368 = scmp.lt.s32.totalorder %s14, 7
      %s369 = scalar_select %p368, %s14, 7
      %s370 = smul.addr %s369, 8
      %s371 = scalar_lea.vmem %s3, %s370
      // Predicated region
      $region33: #{encoder_forward.6} parent=31 // pred_check
        %p372 = pneg %p110
      $region34: #{encoder_forward.6} parent=31 // pred_check_branch
        %374 = sbr.rel (%p372) target = $region36
      $region35: #{encoder_forward.6} parent=31 // pred_region
        _
      $region36: #{encoder_forward.6} parent=31 // pred_fallthru
        _
    $region32: #{encoder_forward.6} parent=5 // pred_fallthru
      _
    %p375 = scmp.le.s32.totalorder 2, %s9
    // Predicated region
    $region37: #{encoder_forward.6} parent=5 // pred_check
      %p376 = pneg %p375
    $region38: #{encoder_forward.6} parent=5 // pred_check_branch
      %378 = sbr.rel (%p376) target = $region40
    $region39: #{encoder_forward.6} parent=5 // pred_region
      %s379 = ssub.s32 %s9, 2
      // Predicated region
      $region41: #{encoder_forward.6} parent=39 // pred_check
        %p380 = pneg %p116
      $region42: #{encoder_forward.6} parent=39 // pred_check_branch
        %382 = sbr.rel (%p380) target = $region44
      $region43: #{encoder_forward.6} parent=39 // pred_region
        %p383 = scmp.lt.s32.totalorder %s15, 7
        %s384 = scalar_select %p383, %s15, 7
        %s385 = smul.addr %s384, 8
        %s386 = scalar_lea.vmem %s3, %s385
      $region44: #{encoder_forward.6} parent=39 // pred_fallthru
        _
    $region40: #{encoder_forward.6} parent=5 // pred_fallthru
      _
  $region6: #{encoder_forward.6} parent=0 // loop_footer
    %s13 = sadd.s32 1, %s9
  $region7: #{encoder_forward.6} parent=0 // loop_footer_branch
    %8 = sbr.rel target = $region3
  $region8: #{encoder_forward.6} parent=0 // loop_exit
    _

// kernel: encoder_forward.8
$region0: #{encoder_forward.8}
  #allocation0 [shape = 'u32[]', space=smem, size = 0x4, offset = 0x4, fixed_abs, tag = 'smem constant byte address 0x4 - core index']
  #allocation1 [shape = 'u32[144,128]{1,0:T(1,128)}', space=vmem, size = 0x12000, scoped, tag = 'internal scratch']
  #allocation2 [shape = 'f32[16,64]{1,0:T(8,128)}', space=vmem, size = 0x2000, scoped, tag = 'scratch operand']
  %s0 = inlined_call_operand.vmem [shape: f32[16,32], index: 0, kind: input, shape index: {}]
  %s1 = inlined_call_operand.vmem [shape: f32[32,64], index: 1, kind: input, shape index: {}]
  %s2 = inlined_call_operand.vmem [shape: f32[1,64], index: 2, kind: input, shape index: {}]
  %s3 = inlined_call_operand.vmem [shape: f32[16,64], index: 3, kind: output, shape index: {}]
  %s4 = sld [smem:[#allocation0]]
  $region30: #{encoder_forward.8} parent=0
    _
  %s6 = ssub.s32 1, %s4
  %s7 = scalar_select 0, %s6, %s4
  // Predicated region
  $region2: #{encoder_forward.8} parent=0 // pred_check
    _
  $region3: #{encoder_forward.8} parent=0 // pred_check_branch
    %9 = sbr.rel (0) target = $region5
  $region4: #{encoder_forward.8} parent=0 // pred_region
    _
  $region5: #{encoder_forward.8} parent=0 // pred_fallthru
    _
  // Predicated region
  $region6: #{encoder_forward.8} parent=0 // pred_check
    _
  $region7: #{encoder_forward.8} parent=0 // pred_check_branch
    %11 = sbr.rel (0) target = $region9
  $region8: #{encoder_forward.8} parent=0 // pred_region
    _
  $region9: #{encoder_forward.8} parent=0 // pred_fallthru
    _
  // Predicated region
  $region10: #{encoder_forward.8} parent=0 // pred_check
    _
  $region11: #{encoder_forward.8} parent=0 // pred_check_branch
    %13 = sbr.rel (0) target = $region13
  $region12: #{encoder_forward.8} parent=0 // pred_region
    _
  $region13: #{encoder_forward.8} parent=0 // pred_fallthru
    _
  %p14 = scmp.eq.s32.totalorder 0, 0
  // Predicated region
  $region14: #{encoder_forward.8} parent=0 // pred_check
    %p15 = pneg %p14
  $region15: #{encoder_forward.8} parent=0 // pred_check_branch
    %17 = sbr.rel (%p15) target = $region17
  $region16: #{encoder_forward.8} parent=0 // pred_region
    %vm18 = vcmask 523264
    %19 = vst.msk [vmem:[#allocation2] sm:$0xff] %vm18, 0.0
    %20 = vst.msk [vmem:[#allocation2 + $0x8] sm:$0xff] %vm18, 0.0
  $region17: #{encoder_forward.8} parent=0 // pred_fallthru
    _
  %v21 = vld [vmem:[#allocation2] sm:$0xff]
  %v22 = vld [vmem:[#allocation2 + $0x8] sm:$0xff]
  %v23 = vld [vmem:[%s0] sm:$0xff]
  %v24 = vld [vmem:[%s0 + $0x8] sm:$0xff]
  %v25 = vld [vmem:[%s1] sm:$0xff]
  %v26 = vld [vmem:[%s1 + $0x8] sm:$0xff]
  %v27 = vld [vmem:[%s1 + $0x10] sm:$0xff]
  %v28 = vld [vmem:[%s1 + $0x18] sm:$0xff]
  %vm29 = vcmask 261120
  %v31 = vsel %vm29, %v23, 0
  %v34 = vsel %vm29, %v24, 0
  %36 = vmatprep.subr.mxu0 0.0
  %37 = vmatpush1.msra.mxu0 %v25
  %38 = vmatprep.subr.mxu0 0.0
  %39 = vmatpush1.msra.mxu0 %v26
  %40 = vmatprep.subr.mxu0 0.0
  %41 = vmatpush1.msra.mxu0 %v27
  %42 = vmatprep.subr.mxu0 0.0
  %43 = vmatpush1.msra.mxu0 %v28
  %44 = vmatprep.subr.mxu0 0.0
  %45 = vmatpush1.msra.mxu0 0.0
  %46 = vmatprep.subr.mxu0 0.0
  %47 = vmatpush1.msra.mxu0 0.0
  %48 = vmatprep.subr.mxu0 0.0
  %49 = vmatpush1.msra.mxu0 0.0
  %50 = vmatprep.subr.mxu0 0.0
  %51 = vmatpush1.msra.mxu0 0.0
  %52 = vmatprep.subr.mxu0 0.0
  %53 = vmatpush1.msra.mxu0 0.0
  %54 = vmatprep.subr.mxu0 0.0
  %55 = vmatpush1.msra.mxu0 0.0
  %56 = vmatprep.subr.mxu0 0.0
  %57 = vmatpush1.msra.mxu0 0.0
  %58 = vmatprep.subr.mxu0 0.0
  %59 = vmatpush1.msra.mxu0 0.0
  %60 = vmatprep.subr.mxu0 0.0
  %61 = vmatpush1.msra.mxu0 0.0
  %62 = vmatprep.subr.mxu0 0.0
  %63 = vmatpush1.msra.mxu0 0.0
  %64 = vmatprep.subr.mxu0 0.0
  %65 = vmatpush1.msra.mxu0 0.0
  %66 = vmatprep.subr.mxu0 0.0
  %67 = vmatpush1.msra.mxu0 0.0
  %68 = vmatprep.subr.mxu0 0.0
  %69 = vmatpush1.msra.mxu0 0.0
  %70 = vmatprep.subr.mxu0 0.0
  %71 = vmatpush1.msra.mxu0 0.0
  %72 = vmatprep.subr.mxu0 0.0
  %73 = vmatpush1.msra.mxu0 0.0
  %74 = vmatprep.subr.mxu0 0.0
  %75 = vmatpush1.msra.mxu0 0.0
  %76 = vmatprep.subr.mxu0 0.0
  %77 = vmatpush1.msra.mxu0 0.0
  %78 = vmatprep.subr.mxu0 0.0
  %79 = vmatpush1.msra.mxu0 0.0
  %80 = vmatprep.subr.mxu0 0.0
  %81 = vmatpush1.msra.mxu0 0.0
  %82 = vmatprep.subr.mxu0 0.0
  %83 = vmatpush1.msra.mxu0 0.0
  %84 = vmatprep.subr.mxu0 0.0
  %85 = vmatpush1.msra.mxu0 0.0
  %86 = vmatprep.subr.mxu0 0.0
  %87 = vmatpush1.msra.mxu0 0.0
  %88 = vmatprep.subr.mxu0 0.0
  %89 = vmatpush1.msra.mxu0 0.0
  %90 = vmatprep.subr.mxu0 0.0
  %91 = vmatpush1.msra.mxu0 0.0
  %92 = vmatprep.subr.mxu0 0.0
  %93 = vmatpush1.msra.mxu0 0.0
  %94 = vmatprep.subr.mxu0 0.0
  %95 = vmatpush1.msra.mxu0 0.0
  %96 = vmatprep.subr.mxu0 0.0
  %97 = vmatpush1.msra.mxu0 0.0
  %98 = vmatprep.subr.mxu0 0.0
  %99 = vmatpush1.msra.mxu0 0.0
  %100 = vmatprep.mubr.f32.mxu0 0.0
  %101 = vmatmul.mubr.f32.gmra.mrb[0].mxu0 %v31
  %v102 = vpop.f32.mrb[0].mxu0
  %v103 = vadd.f32 0.0, %v102
  %v104 = vpop.f32.mrb[0].mxu0
  %105 = vmatprep.mubr.f32.mxu0 0.0
  %106 = vmatmul.mubr.f32.gmra.mrb[0].mxu0 %v34
  %v107 = vpop.f32.mrb[0].mxu0
  %v108 = vadd.f32 0.0, %v107
  %v109 = vpop.f32.mrb[0].mxu0
  %110 = vdwg.mxu0
  %v111 = vadd.f32 %v21, %v103
  %v112 = vadd.f32 %v22, %v108
  %vm113 = vcmask 523264
  %114 = vst.msk [vmem:[#allocation2] sm:$0xff] %vm113, %v111
  %115 = vst.msk [vmem:[#allocation2 + $0x8] sm:$0xff] %vm113, %v112
  // Predicated region
  $region18: #{encoder_forward.8} parent=0 // pred_check
    %p116 = pneg %p14
  $region19: #{encoder_forward.8} parent=0 // pred_check_branch
    %118 = sbr.rel (%p116) target = $region21
  $region20: #{encoder_forward.8} parent=0 // pred_region
    %v119 = vld [vmem:[#allocation2] sm:$0xff]
    %v120 = vld [vmem:[#allocation2 + $0x8] sm:$0xff]
    %v121 = vld [vmem:[%s2] sm:$0x1]
    %v123 = vlaneseq
    %v124 = vshrl.u32 %v123, 7
    %v125 = vsub.s32 0, %v124
    %v126 = vrot.slane %v121, %v125
    %v128 = vadd.f32 %v119, %v126
    %v129 = vadd.f32 %v120, %v126
    %v130 = vmax.f32 %v128, 0.0
    %v131 = vmax.f32 %v129, 0.0
    %132 = vst.msk [vmem:[%s3] sm:$0xff] %vm113, %v130
    %133 = vst.msk [vmem:[%s3 + $0x8] sm:$0xff] %vm113, %v131
  $region21: #{encoder_forward.8} parent=0 // pred_fallthru
    _
  // Predicated region
  $region22: #{encoder_forward.8} parent=0 // pred_check
    _
  $region23: #{encoder_forward.8} parent=0 // pred_check_branch
    %135 = sbr.rel (0) target = $region25
  $region24: #{encoder_forward.8} parent=0 // pred_region
    _
  $region25: #{encoder_forward.8} parent=0 // pred_fallthru
    _
  // Predicated region
  $region26: #{encoder_forward.8} parent=0 // pred_check
    _
  $region27: #{encoder_forward.8} parent=0 // pred_check_branch
    %137 = sbr.rel (0) target = $region29
  $region28: #{encoder_forward.8} parent=0 // pred_region
    _
  $region29: #{encoder_forward.8} parent=0 // pred_fallthru
    _

// kernel: encoder_forward.7
$region0: #{encoder_forward.7}
  #allocation0 [shape = 'u32[]', space=smem, size = 0x4, offset = 0x4, fixed_abs, tag = 'smem constant byte address 0x4 - core index']
  #allocation1 [shape = 'u32[144,128]{1,0:T(1,128)}', space=vmem, size = 0x12000, scoped, tag = 'internal scratch']
  #allocation2 [shape = 'f32[16,32]{1,0:T(8,128)}', space=vmem, size = 0x2000, scoped, tag = 'scratch operand']
  %s0 = inlined_call_operand.vmem [shape: f32[16,32], index: 0, kind: input, shape index: {}]
  %s1 = inlined_call_operand.vmem [shape: f32[32,32], index: 1, kind: input, shape index: {}]
  %s2 = inlined_call_operand.vmem [shape: f32[1,32], index: 2, kind: input, shape index: {}]
  %s3 = inlined_call_operand.vmem [shape: f32[16,32], index: 3, kind: input, shape index: {}]
  %s4 = inlined_call_operand.vmem [shape: f32[1,32], index: 4, kind: input, shape index: {}]
  %s5 = inlined_call_operand.vmem [shape: f32[1,32], index: 5, kind: input, shape index: {}]
  %s6 = inlined_call_operand.vmem [shape: f32[16,32], index: 6, kind: output, shape index: {}]
  %s7 = sld [smem:[#allocation0]]
  $region42: #{encoder_forward.7} parent=0
    _
  %s9 = ssub.s32 1, %s7
  %s10 = scalar_select 0, %s9, %s7
  // Predicated region
  $region2: #{encoder_forward.7} parent=0 // pred_check
    _
  $region3: #{encoder_forward.7} parent=0 // pred_check_branch
    %12 = sbr.rel (0) target = $region5
  $region4: #{encoder_forward.7} parent=0 // pred_region
    _
  $region5: #{encoder_forward.7} parent=0 // pred_fallthru
    _
  // Predicated region
  $region6: #{encoder_forward.7} parent=0 // pred_check
    _
  $region7: #{encoder_forward.7} parent=0 // pred_check_branch
    %14 = sbr.rel (0) target = $region9
  $region8: #{encoder_forward.7} parent=0 // pred_region
    _
  $region9: #{encoder_forward.7} parent=0 // pred_fallthru
    _
  // Predicated region
  $region10: #{encoder_forward.7} parent=0 // pred_check
    _
  $region11: #{encoder_forward.7} parent=0 // pred_check_branch
    %16 = sbr.rel (0) target = $region13
  $region12: #{encoder_forward.7} parent=0 // pred_region
    _
  $region13: #{encoder_forward.7} parent=0 // pred_fallthru
    _
  // Predicated region
  $region14: #{encoder_forward.7} parent=0 // pred_check
    _
  $region15: #{encoder_forward.7} parent=0 // pred_check_branch
    %18 = sbr.rel (0) target = $region17
  $region16: #{encoder_forward.7} parent=0 // pred_region
    _
  $region17: #{encoder_forward.7} parent=0 // pred_fallthru
    _
  // Predicated region
  $region18: #{encoder_forward.7} parent=0 // pred_check
    _
  $region19: #{encoder_forward.7} parent=0 // pred_check_branch
    %20 = sbr.rel (0) target = $region21
  $region20: #{encoder_forward.7} parent=0 // pred_region
    _
  $region21: #{encoder_forward.7} parent=0 // pred_fallthru
    _
  // Predicated region
  $region22: #{encoder_forward.7} parent=0 // pred_check
    _
  $region23: #{encoder_forward.7} parent=0 // pred_check_branch
    %22 = sbr.rel (0) target = $region25
  $region24: #{encoder_forward.7} parent=0 // pred_region
    _
  $region25: #{encoder_forward.7} parent=0 // pred_fallthru
    _
  %p23 = scmp.eq.s32.totalorder 0, 0
  // Predicated region
  $region26: #{encoder_forward.7} parent=0 // pred_check
    %p24 = pneg %p23
  $region27: #{encoder_forward.7} parent=0 // pred_check_branch
    %26 = sbr.rel (%p24) target = $region29
  $region28: #{encoder_forward.7} parent=0 // pred_region
    %vm27 = vcmask 261120
    %28 = vst.msk [vmem:[#allocation2] sm:$0xff] %vm27, 0.0
    %29 = vst.msk [vmem:[#allocation2 + $0x8] sm:$0xff] %vm27, 0.0
  $region29: #{encoder_forward.7} parent=0 // pred_fallthru
    _
  %v30 = vld [vmem:[#allocation2] sm:$0xff]
  %v31 = vld [vmem:[#allocation2 + $0x8] sm:$0xff]
  %v32 = vld [vmem:[%s0] sm:$0xff]
  %v33 = vld [vmem:[%s0 + $0x8] sm:$0xff]
  %v34 = vld [vmem:[%s1] sm:$0xff]
  %v35 = vld [vmem:[%s1 + $0x8] sm:$0xff]
  %v36 = vld [vmem:[%s1 + $0x10] sm:$0xff]
  %v37 = vld [vmem:[%s1 + $0x18] sm:$0xff]
  %vm38 = vcmask 261120
  %v40 = vsel %vm38, %v32, 0
  %v43 = vsel %vm38, %v33, 0
  %45 = vmatprep.subr.mxu0 0.0
  %46 = vmatpush1.msra.mxu0 %v34
  %47 = vmatprep.subr.mxu0 0.0
  %48 = vmatpush1.msra.mxu0 %v35
  %49 = vmatprep.subr.mxu0 0.0
  %50 = vmatpush1.msra.mxu0 %v36
  %51 = vmatprep.subr.mxu0 0.0
  %52 = vmatpush1.msra.mxu0 %v37
  %53 = vmatprep.subr.mxu0 0.0
  %54 = vmatpush1.msra.mxu0 0.0
  %55 = vmatprep.subr.mxu0 0.0
  %56 = vmatpush1.msra.mxu0 0.0
  %57 = vmatprep.subr.mxu0 0.0
  %58 = vmatpush1.msra.mxu0 0.0
  %59 = vmatprep.subr.mxu0 0.0
  %60 = vmatpush1.msra.mxu0 0.0
  %61 = vmatprep.subr.mxu0 0.0
  %62 = vmatpush1.msra.mxu0 0.0
  %63 = vmatprep.subr.mxu0 0.0
  %64 = vmatpush1.msra.mxu0 0.0
  %65 = vmatprep.subr.mxu0 0.0
  %66 = vmatpush1.msra.mxu0 0.0
  %67 = vmatprep.subr.mxu0 0.0
  %68 = vmatpush1.msra.mxu0 0.0
  %69 = vmatprep.subr.mxu0 0.0
  %70 = vmatpush1.msra.mxu0 0.0
  %71 = vmatprep.subr.mxu0 0.0
  %72 = vmatpush1.msra.mxu0 0.0
  %73 = vmatprep.subr.mxu0 0.0
  %74 = vmatpush1.msra.mxu0 0.0
  %75 = vmatprep.subr.mxu0 0.0
  %76 = vmatpush1.msra.mxu0 0.0
  %77 = vmatprep.subr.mxu0 0.0
  %78 = vmatpush1.msra.mxu0 0.0
  %79 = vmatprep.subr.mxu0 0.0
  %80 = vmatpush1.msra.mxu0 0.0
  %81 = vmatprep.subr.mxu0 0.0
  %82 = vmatpush1.msra.mxu0 0.0
  %83 = vmatprep.subr.mxu0 0.0
  %84 = vmatpush1.msra.mxu0 0.0
  %85 = vmatprep.subr.mxu0 0.0
  %86 = vmatpush1.msra.mxu0 0.0
  %87 = vmatprep.subr.mxu0 0.0
  %88 = vmatpush1.msra.mxu0 0.0
  %89 = vmatprep.subr.mxu0 0.0
  %90 = vmatpush1.msra.mxu0 0.0
  %91 = vmatprep.subr.mxu0 0.0
  %92 = vmatpush1.msra.mxu0 0.0
  %93 = vmatprep.subr.mxu0 0.0
  %94 = vmatpush1.msra.mxu0 0.0
  %95 = vmatprep.subr.mxu0 0.0
  %96 = vmatpush1.msra.mxu0 0.0
  %97 = vmatprep.subr.mxu0 0.0
  %98 = vmatpush1.msra.mxu0 0.0
  %99 = vmatprep.subr.mxu0 0.0
  %100 = vmatpush1.msra.mxu0 0.0
  %101 = vmatprep.subr.mxu0 0.0
  %102 = vmatpush1.msra.mxu0 0.0
  %103 = vmatprep.subr.mxu0 0.0
  %104 = vmatpush1.msra.mxu0 0.0
  %105 = vmatprep.subr.mxu0 0.0
  %106 = vmatpush1.msra.mxu0 0.0
  %107 = vmatprep.subr.mxu0 0.0
  %108 = vmatpush1.msra.mxu0 0.0
  %109 = vmatprep.mubr.f32.mxu0 0.0
  %110 = vmatmul.mubr.f32.gmra.mrb[0].mxu0 %v40
  %v111 = vpop.f32.mrb[0].mxu0
  %v112 = vadd.f32 0.0, %v111
  %v113 = vpop.f32.mrb[0].mxu0
  %114 = vmatprep.mubr.f32.mxu0 0.0
  %115 = vmatmul.mubr.f32.gmra.mrb[0].mxu0 %v43
  %v116 = vpop.f32.mrb[0].mxu0
  %v117 = vadd.f32 0.0, %v116
  %v118 = vpop.f32.mrb[0].mxu0
  %119 = vdwg.mxu0
  %v120 = vadd.f32 %v30, %v112
  %v121 = vadd.f32 %v31, %v117
  %122 = vst.msk [vmem:[#allocation2] sm:$0xff] %vm38, %v120
  %123 = vst.msk [vmem:[#allocation2 + $0x8] sm:$0xff] %vm38, %v121
  // Predicated region
  $region30: #{encoder_forward.7} parent=0 // pred_check
    %p124 = pneg %p23
  $region31: #{encoder_forward.7} parent=0 // pred_check_branch
    %126 = sbr.rel (%p124) target = $region33
  $region32: #{encoder_forward.7} parent=0 // pred_region
    %v127 = vld [vmem:[#allocation2] sm:$0xff]
    %v128 = vld [vmem:[#allocation2 + $0x8] sm:$0xff]
    %v129 = vld [vmem:[%s2] sm:$0x1]
    %v131 = vlaneseq
    %v132 = vshrl.u32 %v131, 7
    %v133 = vsub.s32 0, %v132
    %v134 = vrot.slane %v129, %v133
    %v136 = vadd.f32 %v127, %v134
    %v137 = vadd.f32 %v128, %v134
    %v138 = vld [vmem:[%s3] sm:$0xff]
    %v139 = vld [vmem:[%s3 + $0x8] sm:$0xff]
    %v140 = vadd.f32 %v136, %v138
    %v141 = vadd.f32 %v137, %v139
    %v142 = vsel %vm38, %v140, 0.0
    %143 = vadd.xlane.f32.xlu0 %v142
    %v144 = vpop.xlane.xlu0 %143
    %v145 = vsel %vm38, %v141, 0.0
    %146 = vadd.xlane.f32.xlu0 %v145
    %v147 = vpop.xlane.xlu0 %146
    %v148 = vrcp.pop 32.0
    %v149 = vmul.f32 %v144, %v148
    %v150 = vmul.f32 %v147, %v148
    %v151 = vsub.f32 %v140, %v149
    %v152 = vsub.f32 %v141, %v150
    %v153 = vmul.f32 %v151, %v151
    %v154 = vmul.f32 %v152, %v152
    %v155 = vsel %vm38, %v153, 0.0
    %156 = vadd.xlane.f32.xlu0 %v155
    %v157 = vpop.xlane.xlu0 %156
    %v158 = vsel %vm38, %v154, 0.0
    %159 = vadd.xlane.f32.xlu0 %v158
    %v160 = vpop.xlane.xlu0 %159
    %v161 = vmul.f32 %v157, %v148
    %v162 = vmul.f32 %v160, %v148
    %v163 = vadd.f32 %v161, 1e-05
    %v164 = vadd.f32 %v162, 1e-05
    %v165 = vrsqrt.pop %v163
    %v166 = vrsqrt.pop %v164
    %v167 = vmul.f32 %v151, %v165
    %v168 = vmul.f32 %v152, %v166
    %v169 = vld [vmem:[%s4] sm:$0x1]
    %v171 = vlaneseq
    %v172 = vshrl.u32 %v171, 7
    %v173 = vsub.s32 0, %v172
    %v174 = vrot.slane %v169, %v173
    %v176 = vmul.f32 %v167, %v174
    %v177 = vmul.f32 %v168, %v174
    %v178 = vld [vmem:[%s5] sm:$0x1]
    %v180 = vlaneseq
    %v181 = vshrl.u32 %v180, 7
    %v182 = vsub.s32 0, %v181
    %v183 = vrot.slane %v178, %v182
    %v185 = vadd.f32 %v176, %v183
    %v186 = vadd.f32 %v177, %v183
    %187 = vst.msk [vmem:[%s6] sm:$0xff] %vm38, %v185
    %188 = vst.msk [vmem:[%s6 + $0x8] sm:$0xff] %vm38, %v186
  $region33: #{encoder_forward.7} parent=0 // pred_fallthru
    _
  // Predicated region
  $region34: #{encoder_forward.7} parent=0 // pred_check
    _
  $region35: #{encoder_forward.7} parent=0 // pred_check_branch
    %190 = sbr.rel (0) target = $region37
  $region36: #{encoder_forward.7} parent=0 // pred_region
    _
  $region37: #{encoder_forward.7} parent=0 // pred_fallthru
    _
  // Predicated region
  $region38: #{encoder_forward.7} parent=0 // pred_check
    _
  $region39: #{encoder_forward.7} parent=0 // pred_check_branch
    %192 = sbr.rel (0) target = $region41
  $region40: #{encoder_forward.7} parent=0 // pred_region
    _
  $region41: #{encoder_forward.7} parent=0 // pred_fallthru
    _

// kernel: encoder_forward.9
$region0: #{encoder_forward.9}
  #allocation0 [shape = 'u32[]', space=smem, size = 0x4, offset = 0x4, fixed_abs, tag = 'smem constant byte address 0x4 - core index']
  #allocation1 [shape = 'u32[144,128]{1,0:T(1,128)}', space=vmem, size = 0x12000, scoped, tag = 'internal scratch']
  #allocation2 [shape = 'f32[16,32]{1,0:T(8,128)}', space=vmem, size = 0x2000, scoped, tag = 'scratch operand']
  %s0 = inlined_call_operand.vmem [shape: f32[16,64], index: 0, kind: input, shape index: {}]
  %s1 = inlined_call_operand.vmem [shape: f32[64,32], index: 1, kind: input, shape index: {}]
  %s2 = inlined_call_operand.vmem [shape: f32[1,32], index: 2, kind: input, shape index: {}]
  %s3 = inlined_call_operand.vmem [shape: f32[16,32], index: 3, kind: input, shape index: {}]
  %s4 = inlined_call_operand.vmem [shape: f32[1,32], index: 4, kind: input, shape index: {}]
  %s5 = inlined_call_operand.vmem [shape: f32[1,32], index: 5, kind: input, shape index: {}]
  %s6 = inlined_call_operand.hbm [shape: f32[16,32], index: 6, kind: output, shape index: {}]
  %s7 = sld [smem:[#allocation0]]
  $region42: #{encoder_forward.9} parent=0
    _
  %s9 = ssub.s32 1, %s7
  %s10 = scalar_select 0, %s9, %s7
  $region1: #{encoder_forward.9} parent=0
    #allocation3 [shape = 'u8[8192]{0}', space=vmem, size = 0x2000, scoped, tag = 'output window, operand 0, single buffered']
    #allocation4 [shape = 's32[1]{0}', space=sflag, size = 0x4, scoped, tag = 'scoped memory for encoder_forward.9']
    %11 = vsyncpa [#allocation4], 0
    // Predicated region
    $region2: #{encoder_forward.9} parent=1 // pred_check
      _
    $region3: #{encoder_forward.9} parent=1 // pred_check_branch
      %13 = sbr.rel (0) target = $region5
    $region4: #{encoder_forward.9} parent=1 // pred_region
      _
    $region5: #{encoder_forward.9} parent=1 // pred_fallthru
      _
    // Predicated region
    $region6: #{encoder_forward.9} parent=1 // pred_check
      _
    $region7: #{encoder_forward.9} parent=1 // pred_check_branch
      %15 = sbr.rel (0) target = $region9
    $region8: #{encoder_forward.9} parent=1 // pred_region
      _
    $region9: #{encoder_forward.9} parent=1 // pred_fallthru
      _
    // Predicated region
    $region10: #{encoder_forward.9} parent=1 // pred_check
      _
    $region11: #{encoder_forward.9} parent=1 // pred_check_branch
      %17 = sbr.rel (0) target = $region13
    $region12: #{encoder_forward.9} parent=1 // pred_region
      _
    $region13: #{encoder_forward.9} parent=1 // pred_fallthru
      _
    // Predicated region
    $region14: #{encoder_forward.9} parent=1 // pred_check
      _
    $region15: #{encoder_forward.9} parent=1 // pred_check_branch
      %19 = sbr.rel (0) target = $region17
    $region16: #{encoder_forward.9} parent=1 // pred_region
      _
    $region17: #{encoder_forward.9} parent=1 // pred_fallthru
      _
    // Predicated region
    $region18: #{encoder_forward.9} parent=1 // pred_check
      _
    $region19: #{encoder_forward.9} parent=1 // pred_check_branch
      %21 = sbr.rel (0) target = $region21
    $region20: #{encoder_forward.9} parent=1 // pred_region
      _
    $region21: #{encoder_forward.9} parent=1 // pred_fallthru
      _
    // Predicated region
    $region22: #{encoder_forward.9} parent=1 // pred_check
      _
    $region23: #{encoder_forward.9} parent=1 // pred_check_branch
      %23 = sbr.rel (0) target = $region25
    $region24: #{encoder_forward.9} parent=1 // pred_region
      _
    $region25: #{encoder_forward.9} parent=1 // pred_fallthru
      _
    %p24 = scmp.eq.s32.totalorder 0, 0
    // Predicated region
    $region26: #{encoder_forward.9} parent=1 // pred_check
      %p25 = pneg %p24
    $region27: #{encoder_forward.9} parent=1 // pred_check_branch
      %27 = sbr.rel (%p25) target = $region29
    $region28: #{encoder_forward.9} parent=1 // pred_region
      %vm28 = vcmask 261120
      %29 = vst.msk [vmem:[#allocation2] sm:$0xff] %vm28, 0.0
      %30 = vst.msk [vmem:[#allocation2 + $0x8] sm:$0xff] %vm28, 0.0
    $region29: #{encoder_forward.9} parent=1 // pred_fallthru
      _
    %v31 = vld [vmem:[#allocation2] sm:$0xff]
    %v32 = vld [vmem:[#allocation2 + $0x8] sm:$0xff]
    %v33 = vld [vmem:[%s0] sm:$0xff]
    %v34 = vld [vmem:[%s0 + $0x8] sm:$0xff]
    %v35 = vld [vmem:[%s1] sm:$0xff]
    %v36 = vld [vmem:[%s1 + $0x8] sm:$0xff]
    %v37 = vld [vmem:[%s1 + $0x10] sm:$0xff]
    %v38 = vld [vmem:[%s1 + $0x18] sm:$0xff]
    %v39 = vld [vmem:[%s1 + $0x20] sm:$0xff]
    %v40 = vld [vmem:[%s1 + $0x28] sm:$0xff]
    %v41 = vld [vmem:[%s1 + $0x30] sm:$0xff]
    %v42 = vld [vmem:[%s1 + $0x38] sm:$0xff]
    %vm43 = vcmask 523264
    %v45 = vsel %vm43, %v33, 0
    %v48 = vsel %vm43, %v34, 0
    %50 = vmatprep.subr.mxu0 0.0
    %51 = vmatpush1.msra.mxu0 %v35
    %52 = vmatprep.subr.mxu0 0.0
    %53 = vmatpush1.msra.mxu0 %v36
    %54 = vmatprep.subr.mxu0 0.0
    %55 = vmatpush1.msra.mxu0 %v37
    %56 = vmatprep.subr.mxu0 0.0
    %57 = vmatpush1.msra.mxu0 %v38
    %58 = vmatprep.subr.mxu0 0.0
    %59 = vmatpush1.msra.mxu0 %v39
    %60 = vmatprep.subr.mxu0 0.0
    %61 = vmatpush1.msra.mxu0 %v40
    %62 = vmatprep.subr.mxu0 0.0
    %63 = vmatpush1.msra.mxu0 %v41
    %64 = vmatprep.subr.mxu0 0.0
    %65 = vmatpush1.msra.mxu0 %v42
    %66 = vmatprep.subr.mxu0 0.0
    %67 = vmatpush1.msra.mxu0 0.0
    %68 = vmatprep.subr.mxu0 0.0
    %69 = vmatpush1.msra.mxu0 0.0
    %70 = vmatprep.subr.mxu0 0.0
    %71 = vmatpush1.msra.mxu0 0.0
    %72 = vmatprep.subr.mxu0 0.0
    %73 = vmatpush1.msra.mxu0 0.0
    %74 = vmatprep.subr.mxu0 0.0
    %75 = vmatpush1.msra.mxu0 0.0
    %76 = vmatprep.subr.mxu0 0.0
    %77 = vmatpush1.msra.mxu0 0.0
    %78 = vmatprep.subr.mxu0 0.0
    %79 = vmatpush1.msra.mxu0 0.0
    %80 = vmatprep.subr.mxu0 0.0
    %81 = vmatpush1.msra.mxu0 0.0
    %82 = vmatprep.subr.mxu0 0.0
    %83 = vmatpush1.msra.mxu0 0.0
    %84 = vmatprep.subr.mxu0 0.0
    %85 = vmatpush1.msra.mxu0 0.0
    %86 = vmatprep.subr.mxu0 0.0
    %87 = vmatpush1.msra.mxu0 0.0
    %88 = vmatprep.subr.mxu0 0.0
    %89 = vmatpush1.msra.mxu0 0.0
    %90 = vmatprep.subr.mxu0 0.0
    %91 = vmatpush1.msra.mxu0 0.0
    %92 = vmatprep.subr.mxu0 0.0
    %93 = vmatpush1.msra.mxu0 0.0
    %94 = vmatprep.subr.mxu0 0.0
    %95 = vmatpush1.msra.mxu0 0.0
    %96 = vmatprep.subr.mxu0 0.0
    %97 = vmatpush1.msra.mxu0 0.0
    %98 = vmatprep.subr.mxu0 0.0
    %99 = vmatpush1.msra.mxu0 0.0
    %100 = vmatprep.subr.mxu0 0.0
    %101 = vmatpush1.msra.mxu0 0.0
    %102 = vmatprep.subr.mxu0 0.0
    %103 = vmatpush1.msra.mxu0 0.0
    %104 = vmatprep.subr.mxu0 0.0
    %105 = vmatpush1.msra.mxu0 0.0
    %106 = vmatprep.subr.mxu0 0.0
    %107 = vmatpush1.msra.mxu0 0.0
    %108 = vmatprep.subr.mxu0 0.0
    %109 = vmatpush1.msra.mxu0 0.0
    %110 = vmatprep.subr.mxu0 0.0
    %111 = vmatpush1.msra.mxu0 0.0
    %112 = vmatprep.subr.mxu0 0.0
    %113 = vmatpush1.msra.mxu0 0.0
    %114 = vmatprep.mubr.f32.mxu0 0.0
    %115 = vmatmul.mubr.f32.gmra.mrb[0].mxu0 %v45
    %v116 = vpop.f32.mrb[0].mxu0
    %v117 = vadd.f32 0.0, %v116
    %v118 = vpop.f32.mrb[0].mxu0
    %119 = vmatprep.mubr.f32.mxu0 0.0
    %120 = vmatmul.mubr.f32.gmra.mrb[0].mxu0 %v48
    %v121 = vpop.f32.mrb[0].mxu0
    %v122 = vadd.f32 0.0, %v121
    %v123 = vpop.f32.mrb[0].mxu0
    %124 = vdwg.mxu0
    %v125 = vadd.f32 %v31, %v117
    %v126 = vadd.f32 %v32, %v122
    %vm127 = vcmask 261120
    %128 = vst.msk [vmem:[#allocation2] sm:$0xff] %vm127, %v125
    %129 = vst.msk [vmem:[#allocation2 + $0x8] sm:$0xff] %vm127, %v126
    // Predicated region
    $region30: #{encoder_forward.9} parent=1 // pred_check
      %p130 = pneg %p24
    $region31: #{encoder_forward.9} parent=1 // pred_check_branch
      %132 = sbr.rel (%p130) target = $region33
    $region32: #{encoder_forward.9} parent=1 // pred_region
      %v133 = vld [vmem:[#allocation2] sm:$0xff]
      %v134 = vld [vmem:[#allocation2 + $0x8] sm:$0xff]
      %v135 = vld [vmem:[%s2] sm:$0x1]
      %v137 = vlaneseq
      %v138 = vshrl.u32 %v137, 7
      %v139 = vsub.s32 0, %v138
      %v140 = vrot.slane %v135, %v139
      %v142 = vadd.f32 %v133, %v140
      %v143 = vadd.f32 %v134, %v140
      %v144 = vld [vmem:[%s3] sm:$0xff]
      %v145 = vld [vmem:[%s3 + $0x8] sm:$0xff]
      %v146 = vadd.f32 %v142, %v144
      %v147 = vadd.f32 %v143, %v145
      %v148 = vsel %vm127, %v146, 0.0
      %149 = vadd.xlane.f32.xlu0 %v148
      %v150 = vpop.xlane.xlu0 %149
      %v151 = vsel %vm127, %v147, 0.0
      %152 = vadd.xlane.f32.xlu0 %v151
      %v153 = vpop.xlane.xlu0 %152
      %v154 = vrcp.pop 32.0
      %v155 = vmul.f32 %v150, %v154
      %v156 = vmul.f32 %v153, %v154
      %v157 = vsub.f32 %v146, %v155
      %v158 = vsub.f32 %v147, %v156
      %v159 = vmul.f32 %v157, %v157
      %v160 = vmul.f32 %v158, %v158
      %v161 = vsel %vm127, %v159, 0.0
      %162 = vadd.xlane.f32.xlu0 %v161
      %v163 = vpop.xlane.xlu0 %162
      %v164 = vsel %vm127, %v160, 0.0
      %165 = vadd.xlane.f32.xlu0 %v164
      %v166 = vpop.xlane.xlu0 %165
      %v167 = vmul.f32 %v163, %v154
      %v168 = vmul.f32 %v166, %v154
      %v169 = vadd.f32 %v167, 1e-05
      %v170 = vadd.f32 %v168, 1e-05
      %v171 = vrsqrt.pop %v169
      %v172 = vrsqrt.pop %v170
      %v173 = vmul.f32 %v157, %v171
      %v174 = vmul.f32 %v158, %v172
      %v175 = vld [vmem:[%s4] sm:$0x1]
      %v177 = vlaneseq
      %v178 = vshrl.u32 %v177, 7
      %v179 = vsub.s32 0, %v178
      %v180 = vrot.slane %v175, %v179
      %v182 = vmul.f32 %v173, %v180
      %v183 = vmul.f32 %v174, %v180
      %v184 = vld [vmem:[%s5] sm:$0x1]
      %v186 = vlaneseq
      %v187 = vshrl.u32 %v186, 7
      %v188 = vsub.s32 0, %v187
      %v189 = vrot.slane %v184, %v188
      %v191 = vadd.f32 %v182, %v189
      %v192 = vadd.f32 %v183, %v189
      %193 = vst.msk [vmem:[#allocation3] sm:$0xff] %vm127, %v191
      %194 = vst.msk [vmem:[#allocation3 + $0x8] sm:$0xff] %vm127, %v192
    $region33: #{encoder_forward.9} parent=1 // pred_fallthru
      _
    // Predicated region
    $region34: #{encoder_forward.9} parent=1 // pred_check
      _
    $region35: #{encoder_forward.9} parent=1 // pred_check_branch
      %196 = sbr.rel (0) target = $region37
    $region36: #{encoder_forward.9} parent=1 // pred_region
      %s198 = ssub.s32 256, 256
      %199 = vsyncadd [#allocation4], %s198
      %s200 = sshll.u32 [#allocation3], 4
      %s201 = int_to_ptr.vmem [resolvable:$true] %s200
      %206 = dma.vmem_to_hbm [thread:$0]  %s201, 256, %s6, [#allocation4], 128, 128, 8
    $region37: #{encoder_forward.9} parent=1 // pred_fallthru
      _
    // Predicated region
    $region38: #{encoder_forward.9} parent=1 // pred_check
      _
    $region39: #{encoder_forward.9} parent=1 // pred_check_branch
      %208 = sbr.rel (0) target = $region41
    $region40: #{encoder_forward.9} parent=1 // pred_region
      %209 = dma.done [#allocation4], 256
    $region41: #{encoder_forward.9} parent=1 // pred_fallthru
      _
    %210 = vsyncpa [#allocation4], 1

</llo_original>
